<compile_context>
chip_gen: v6e
topology: v6e:2x2x1
jax: 0.10.0
libtpu: 0.0.40
codegen_flags: <defaults>
</compile_context>

<pallas_src>
import math

import jax
import jax.numpy as jnp
from jax.experimental import pallas as pl
from jax.experimental.pallas import tpu as pltpu

_LANE = 128
_TILE_BYTES = 4 << 20            # ~4 MiB per array per pipeline buffer
_VMEM_LIMIT = 32 << 20           # 3 arrays x 2 buffers x 4 MiB = 24 MiB (v5e needs explicit raise)
_SMALL_FALLBACK_ELEMS = 1 << 18  # below ~256K elems, let XLA fuse the add


def _update_kernel(target_ref, source_ref, out_ref):
    # Elementwise hot path: update = target + source
    out_ref[...] = target_ref[...] + source_ref[...]


def _sublane_multiple(dtype) -> int:
    # Sublane packing granularity per dtype width (f32: 8, bf16: 16, int8/fp8: 32).
    return {4: 8, 2: 16, 1: 32}.get(jnp.dtype(dtype).itemsize, 8)


def _round_up(x: int, m: int) -> int:
    return -(-x // m) * m


def _cdiv(a: int, b: int) -> int:
    return -(-a // b)


def _tiled_add_2d(t2, s2):
    """Streamed elementwise add over a lane-dense (rows, cols) layout (cols % 128 == 0)."""
    rows, cols = t2.shape
    itemsize = jnp.dtype(t2.dtype).itemsize
    sub = _sublane_multiple(t2.dtype)

    # Tile size: big enough to amortize per-step overhead (~4 MiB/array/buffer),
    # but split so the grid has >= 2 steps (v7x: work for both TensorCores).
    by_bytes = max(sub, (_TILE_BYTES // (cols * itemsize)) // sub * sub)
    half = max(sub, _round_up(_cdiv(rows, 2), sub))
    tile_rows = min(by_bytes, half)

    grid = (_cdiv(rows, tile_rows),)
    block = pl.BlockSpec((tile_rows, cols), lambda i: (i, 0))

    total = rows * cols
    return pl.pallas_call(
        _update_kernel,
        out_shape=jax.ShapeDtypeStruct((rows, cols), t2.dtype),
        grid=grid,
        in_specs=[block, block],
        out_specs=block,
        compiler_params=pltpu.CompilerParams(
            dimension_semantics=("parallel",),   # rows independent -> v7x 2-TC sharding
            vmem_limit_bytes=_VMEM_LIMIT,
        ),
        cost_estimate=pl.CostEstimate(
            flops=total,
            bytes_accessed=3 * total * itemsize,
            transcendentals=0,
        ),
    )(t2, s2)


def graph_conv_update(target, source, unit_id: int = 0):
    """Pallas equivalent of _GraphConvolutionLayer_Update.forward.

    Both update units are identical parameter-free adds, so `unit_id` is only
    validated, never dispatched on.
    """
    assert unit_id in (0, 1), "unit_id must be 0 or 1"
    assert target.shape == source.shape and target.dtype == source.dtype

    orig_shape = target.shape
    total = math.prod(orig_shape) if orig_shape else 1

    # Tiny/medium workloads: let XLA fuse the add into neighboring ops instead of
    # paying standalone kernel-launch + per-grid-step overhead.
    if total < _SMALL_FALLBACK_ELEMS:
        return target + source

    cols = orig_shape[-1] if len(orig_shape) >= 2 else total

    if cols % _LANE == 0:
        # Already lane-dense: collapsing leading dims is a free bitcast; no pad,
        # no trailing slice, output comes back in the caller's shape.
        rows = total // cols
        out = _tiled_add_2d(target.reshape(rows, cols), source.reshape(rows, cols))
        return out.reshape(orig_shape)

    # Lane-dense packing: flatten to (rows, 128). Pad the flat tail only up to the
    # next multiple of 128 (Pallas masks the ragged last grid block itself).
    pad = (-total) % _LANE

    def to_lane_dense(x):
        flat = x.reshape(-1)
        if pad:
            flat = jnp.pad(flat, (0, pad))
        return flat.reshape(-1, _LANE)

    out = _tiled_add_2d(to_lane_dense(target), to_lane_dense(source))
    flat = out.reshape(-1)
    if pad:
        flat = flat[:total]
    return flat.reshape(orig_shape)


if __name__ == "__main__":
    key = jax.random.PRNGKey(0)

    # Primary small shapes consistent with the module (node features, dim=32).
    # This size stays on the fused-XLA fallback path by design.
    k_t, k_s = jax.random.split(key)
    num_nodes, dim = 256, 32
    target = jax.random.normal(k_t, (num_nodes, dim), dtype=jnp.float32)
    source = jax.random.normal(k_s, (num_nodes, dim), dtype=jnp.float32)

    out0 = graph_conv_update(target, source, unit_id=0)
    out1 = graph_conv_update(target, source, unit_id=1)
    jax.block_until_ready(out0)
    jax.block_until_ready(out1)
    ref = target + source
    assert jnp.allclose(out0, ref, atol=1e-6), "unit 0 mismatch"
    assert jnp.allclose(out1, ref, atol=1e-6), "unit 1 mismatch"

    # Lane-aligned case (last dim % 128 == 0): direct 2-D path, no packing.
    k_t2, k_s2 = jax.random.split(jax.random.PRNGKey(1))
    tgt_al = jax.random.normal(k_t2, (4096, 128), dtype=jnp.float32)
    src_al = jax.random.normal(k_s2, (4096, 128), dtype=jnp.float32)
    out_al = graph_conv_update(tgt_al, src_al, unit_id=1)
    jax.block_until_ready(out_al)
    assert jnp.allclose(out_al, tgt_al + src_al, atol=1e-6), "aligned mismatch"

    # total % 128 == 0 but last dim isn't: free bitcast repack, no pad/slice.
    k_t3, k_s3 = jax.random.split(jax.random.PRNGKey(2))
    tgt_big = jax.random.normal(k_t3, (4096, 96), dtype=jnp.float32)
    src_big = jax.random.normal(k_s3, (4096, 96), dtype=jnp.float32)
    out_big = graph_conv_update(tgt_big, src_big, unit_id=0)
    jax.block_until_ready(out_big)
    assert jnp.allclose(out_big, tgt_big + src_big, atol=1e-6), "big mismatch"

    # Ragged case: total not a multiple of 128 -> minimal pad + masked last block.
    k_t4, k_s4 = jax.random.split(jax.random.PRNGKey(3))
    tgt_rag = jax.random.normal(k_t4, (2049, 129), dtype=jnp.float32)
    src_rag = jax.random.normal(k_s4, (2049, 129), dtype=jnp.float32)
    out_rag = graph_conv_update(tgt_rag, src_rag, unit_id=1)
    jax.block_until_ready(out_rag)
    assert jnp.allclose(out_rag, tgt_rag + src_rag, atol=1e-6), "ragged mismatch"

    print("KERNEL_OK")
</pallas_src>

<mosaic_0001>
module attributes {stable_mosaic.version = 11 : i64} {
  func.func @_update_kernel(%arg0: i32, %arg1: memref<2048x128xf32, #tpu.memory_space<vmem>>, %arg2: memref<2048x128xf32, #tpu.memory_space<vmem>>, %arg3: memref<2048x128xf32, #tpu.memory_space<vmem>>) attributes {dimension_semantics = [#tpu.dimension_semantics<parallel>], iteration_bounds = array<i64: 2>, scalar_prefetch = 0 : i64, scratch_operands = 0 : i64, tpu.core_type = #tpu.core_type<tc>, window_params = [{transform_indices = @transform_0, window_bounds = array<i64: 2048, 128>}, {transform_indices = @transform_1, window_bounds = array<i64: 2048, 128>}, {transform_indices = @transform_2, window_bounds = array<i64: 2048, 128>}]} {
    %c0 = arith.constant 0 : index
    %c0_0 = arith.constant 0 : index
    %0 = vector.load %arg1[%c0, %c0_0] : memref<2048x128xf32, #tpu.memory_space<vmem>>, vector<2048x128xf32>
    %c0_1 = arith.constant 0 : index
    %c0_2 = arith.constant 0 : index
    %1 = vector.load %arg2[%c0_1, %c0_2] : memref<2048x128xf32, #tpu.memory_space<vmem>>, vector<2048x128xf32>
    %2 = arith.addf %0, %1 : vector<2048x128xf32>
    %c0_3 = arith.constant 0 : index
    %c0_4 = arith.constant 0 : index
    %3 = vector.load %arg3[%c0_3, %c0_4] : memref<2048x128xf32, #tpu.memory_space<vmem>>, vector<2048x128xf32>
    tpu.vector_store %arg3[%c0_3, %c0_4], %2 {strides = array<i32>} : memref<2048x128xf32, #tpu.memory_space<vmem>>, vector<2048x128xf32>,
    return
  }
  func.func @transform_0(%arg0: i32) -> (i32, i32) {
    %c0_i32 = arith.constant 0 : i32
    %c0_i32_0 = arith.constant 0 : i32
    return %arg0, %c0_i32 : i32, i32
  }
  func.func @transform_1(%arg0: i32) -> (i32, i32) {
    %c0_i32 = arith.constant 0 : i32
    %c0_i32_0 = arith.constant 0 : i32
    return %arg0, %c0_i32 : i32, i32
  }
  func.func @transform_2(%arg0: i32) -> (i32, i32) {
    %c0_i32 = arith.constant 0 : i32
    %c0_i32_0 = arith.constant 0 : i32
    return %arg0, %c0_i32 : i32, i32
  }
}

</mosaic_0001>

<llo_original>
// kernel: tpu_custom_call.1
$region0: #{tpu_custom_call.1}
  #allocation0 [shape = 'u32[]', space=smem, size = 0x4, offset = 0x4, fixed_abs, tag = 'smem constant byte address 0x4 - core index']
  #allocation1 [shape = 'u32[144,128]{1,0:T(1,128)}', space=vmem, size = 0x12000, scoped, tag = 'internal scratch']
  %s0 = inlined_call_operand.hbm [shape: f32[4096,128], index: 0, kind: input, shape index: {}]
  %s1 = inlined_call_operand.hbm [shape: f32[4096,128], index: 1, kind: input, shape index: {}]
  %s2 = inlined_call_operand.hbm [shape: f32[4096,128], index: 2, kind: output, shape index: {}]
  %s3 = sld [smem:[#allocation0]]
  $region49: #{tpu_custom_call.1} parent=0
    _
  %s5 = ssub.s32 1, %s3
  %s6 = scalar_select 0, %s5, %s3
  $region1: #{tpu_custom_call.1} parent=0
    #allocation2 [shape = 'u8[2097152]{0}', space=vmem, size = 0x200000, scoped, tag = 'input window, operand 0']
    #allocation3 [shape = 's32[2]{0}', space=sflag, size = 0x8, scoped, tag = 'scoped memory for tpu_custom_call.1']
    #allocation4 [shape = 's32[2]{0}', space=sflag, size = 0x8, scoped, tag = 'scoped memory for tpu_custom_call.1']
    #allocation5 [shape = 'u8[2097152]{0}', space=vmem, size = 0x200000, scoped, tag = 'input window, operand 1']
    #allocation6 [shape = 's32[2]{0}', space=sflag, size = 0x8, scoped, tag = 'scoped memory for tpu_custom_call.1']
    #allocation7 [shape = 'u8[2097152]{0}', space=vmem, size = 0x200000, scoped, tag = 'output window, operand 0']
    %7 = vsyncpa [#allocation3], 0
    %s8 = scalar_lea.sflag [#allocation3], 1
    %9 = vsyncpa %s8, 0
    %10 = vsyncpa [#allocation6], 0
    %s11 = scalar_lea.sflag [#allocation6], 1
    %12 = vsyncpa %s11, 0
    %13 = vsyncpa [#allocation4], 0
    %s14 = scalar_lea.sflag [#allocation4], 1
    %15 = vsyncpa %s14, 0
    loop: start=0, step=1, limit=4
    $region2: #{tpu_custom_call.1} parent=1 // loop_pre_header
      _
    $region3: #{tpu_custom_call.1} parent=1 // loop_header
      %s17 = sphi 0, %s21
      %p18 = scmp.ge.s32.totalorder %s17, 4
      %s27 = sphi 0, %s29
      %s30 = sphi 0, %s27
      %s31 = sphi 0, %s30
      %s47 = sphi 0, %s31
      %s53 = sphi 0, %s55
      %s56 = sphi 0, %s53
      %s57 = sphi 0, %s56
      %s73 = sphi 0, %s57
      %s79 = sphi 0, %s81
      %s82 = sphi 0, %s79
      %s83 = sphi 0, %s82
      %s99 = sphi 0, %s83
    $region4: #{tpu_custom_call.1} parent=1 // loop_header_branch
      %20 = sbr.rel (%p18) target = $region8
    $region5: #{tpu_custom_call.1} parent=1 // loop_body
      %s22 = ssub.s32 %s17, 1
      %s23 = ssub.s32 %s17, 2
      %s24 = sadd.s32 %s17, 1
      %s25 = ssub.s32 %s17, %s24
      %p26 = scmp.eq.s32.totalorder %s25, 0
      %s28 = sadd.s32 %s27, 1
      %s29 = scalar_select %p26, %s27, %s28
      %p32 = pneg %p26
      %p33 = scmp.eq.s32.totalorder %s17, 1
      %p34 = por %p32, %p33
      %p35 = scmp.ne.s32.totalorder %s27, %s30
      %p36 = scmp.eq.s32.totalorder %s17, 0
      %p37 = por %p35, %p36
      %p38 = scmp.ne.s32.totalorder %s27, %s30
      %p39 = scmp.eq.s32.totalorder %s22, 1
      %p40 = por %p38, %p39
      %p41 = scmp.ne.s32.totalorder %s30, %s31
      %p42 = scmp.eq.s32.totalorder %s22, 0
      %p43 = por %p41, %p42
      %p44 = scmp.ne.s32.totalorder %s30, %s31
      %p45 = scmp.eq.s32.totalorder %s23, 1
      %p46 = por %p44, %p45
      %p48 = scmp.ne.s32.totalorder %s31, %s47
      %p49 = scmp.eq.s32.totalorder %s23, 0
      %p50 = por %p48, %p49
      %s51 = ssub.s32 %s17, %s24
      %p52 = scmp.eq.s32.totalorder %s51, 0
      %s54 = sadd.s32 %s53, 1
      %s55 = scalar_select %p52, %s53, %s54
      %p58 = pneg %p52
      %p59 = scmp.eq.s32.totalorder %s17, 1
      %p60 = por %p58, %p59
      %p61 = scmp.ne.s32.totalorder %s53, %s56
      %p62 = scmp.eq.s32.totalorder %s17, 0
      %p63 = por %p61, %p62
      %p64 = scmp.ne.s32.totalorder %s53, %s56
      %p65 = scmp.eq.s32.totalorder %s22, 1
      %p66 = por %p64, %p65
      %p67 = scmp.ne.s32.totalorder %s56, %s57
      %p68 = scmp.eq.s32.totalorder %s22, 0
      %p69 = por %p67, %p68
      %p70 = scmp.ne.s32.totalorder %s56, %s57
      %p71 = scmp.eq.s32.totalorder %s23, 1
      %p72 = por %p70, %p71
      %p74 = scmp.ne.s32.totalorder %s57, %s73
      %p75 = scmp.eq.s32.totalorder %s23, 0
      %p76 = por %p74, %p75
      %s77 = ssub.s32 %s17, %s24
      %p78 = scmp.eq.s32.totalorder %s77, 0
      %s80 = sadd.s32 %s79, 1
      %s81 = scalar_select %p78, %s79, %s80
      %p84 = pneg %p78
      %p85 = scmp.eq.s32.totalorder %s17, 1
      %p86 = por %p84, %p85
      %p87 = scmp.ne.s32.totalorder %s79, %s82
      %p88 = scmp.eq.s32.totalorder %s17, 0
      %p89 = por %p87, %p88
      %p90 = scmp.ne.s32.totalorder %s79, %s82
      %p91 = scmp.eq.s32.totalorder %s22, 1
      %p92 = por %p90, %p91
      %p93 = scmp.ne.s32.totalorder %s82, %s83
      %p94 = scmp.eq.s32.totalorder %s22, 0
      %p95 = por %p93, %p94
      %p96 = scmp.ne.s32.totalorder %s82, %s83
      %p97 = scmp.eq.s32.totalorder %s23, 1
      %p98 = por %p96, %p97
      %p100 = scmp.ne.s32.totalorder %s83, %s99
      %p101 = scmp.eq.s32.totalorder %s23, 0
      %p102 = por %p100, %p101
      %p103 = scmp.le.s32.totalorder 1, %s17
      %p104 = scmp.lt.s32.totalorder %s17, 3
      %p105 = pnand %p103, %p104
      %p106 = pneg %p105
      // Predicated region
      $region9: #{tpu_custom_call.1} parent=5 // pred_check
        _
      $region10: #{tpu_custom_call.1} parent=5 // pred_check_branch
        %108 = sbr.rel (%p105) target = $region12
      $region11: #{tpu_custom_call.1} parent=5 // pred_region
        %s109 = ssub.s32 %s17, 1
      $region12: #{tpu_custom_call.1} parent=5 // pred_fallthru
        _
      %p110 = scmp.lt.s32.totalorder %s17, 2
      // Predicated region
      $region13: #{tpu_custom_call.1} parent=5 // pred_check
        %p111 = pneg %p110
      $region14: #{tpu_custom_call.1} parent=5 // pred_check_branch
        %113 = sbr.rel (%p111) target = $region16
      $region15: #{tpu_custom_call.1} parent=5 // pred_region
        // Predicated region
        $region17: #{tpu_custom_call.1} parent=15 // pred_check
          %p114 = pneg %p37
        $region18: #{tpu_custom_call.1} parent=15 // pred_check_branch
          %116 = sbr.rel (%p114) target = $region20
        $region19: #{tpu_custom_call.1} parent=15 // pred_region
          %s117 = sand.u32 %s27, 1
          %s118 = scalar_lea.sflag [#allocation3], %s117
          %s119 = sand.u32 %s27, 1
          %s120 = smul.addr %s119, 2048
          %s121 = scalar_lea.vmem [#allocation2], %s120
          %s122 = smul.u32 256, %s17
          %s124 = ssub.s32 32768, 32768
          %125 = vsyncadd %s118, %s124
          %s126 = smul.addr %s122, 128
          %s127 = scalar_lea.hbm %s0, %s126
          %s128 = sshll.u32 %s121, 4
          %s129 = int_to_ptr.vmem [resolvable:$true] %s128
          %134 = dma.hbm_to_vmem [thread:$0]  %s127, 32768, %s129, %s118, 128, 128, 8
        $region20: #{tpu_custom_call.1} parent=15 // pred_fallthru
          _
        // Predicated region
        $region21: #{tpu_custom_call.1} parent=15 // pred_check
          %p135 = pneg %p63
        $region22: #{tpu_custom_call.1} parent=15 // pred_check_branch
          %137 = sbr.rel (%p135) target = $region24
        $region23: #{tpu_custom_call.1} parent=15 // pred_region
          %s138 = sand.u32 %s53, 1
          %s139 = scalar_lea.sflag [#allocation6], %s138
          %s140 = sand.u32 %s53, 1
          %s141 = smul.addr %s140, 2048
          %s142 = scalar_lea.vmem [#allocation5], %s141
          %s143 = smul.u32 256, %s17
          %s145 = ssub.s32 32768, 32768
          %146 = vsyncadd %s139, %s145
          %s147 = smul.addr %s143, 128
          %s148 = scalar_lea.hbm %s1, %s147
          %s149 = sshll.u32 %s142, 4
          %s150 = int_to_ptr.vmem [resolvable:$true] %s149
          %155 = dma.hbm_to_vmem [thread:$0]  %s148, 32768, %s150, %s139, 128, 128, 8
        $region24: #{tpu_custom_call.1} parent=15 // pred_fallthru
          _
      $region16: #{tpu_custom_call.1} parent=5 // pred_fallthru
        _
      %p156 = scmp.le.s32.totalorder 1, %s17
      %p157 = scmp.lt.s32.totalorder %s17, 3
      %p158 = pnand %p156, %p157
      %p159 = pneg %p158
      // Predicated region
      $region25: #{tpu_custom_call.1} parent=5 // pred_check
        _
      $region26: #{tpu_custom_call.1} parent=5 // pred_check_branch
        %161 = sbr.rel (%p158) target = $region28
      $region27: #{tpu_custom_call.1} parent=5 // pred_region
        %s162 = ssub.s32 %s17, 1
        %s163 = sand.u32 %s30, 1
        %s164 = scalar_lea.sflag [#allocation3], %s163
        %s165 = sand.u32 %s30, 1
        %s166 = smul.addr %s165, 2048
        %s167 = scalar_lea.vmem [#allocation2], %s166
        // Predicated region
        $region29: #{tpu_custom_call.1} parent=27 // pred_check
          %p168 = pneg %p43
        $region30: #{tpu_custom_call.1} parent=27 // pred_check_branch
          %170 = sbr.rel (%p168) target = $region32
        $region31: #{tpu_custom_call.1} parent=27 // pred_region
          %171 = dma.done %s164, 32768
        $region32: #{tpu_custom_call.1} parent=27 // pred_fallthru
          _
        %s172 = sand.u32 %s56, 1
        %s173 = scalar_lea.sflag [#allocation6], %s172
        %s174 = sand.u32 %s56, 1
        %s175 = smul.addr %s174, 2048
        %s176 = scalar_lea.vmem [#allocation5], %s175
        // Predicated region
        $region33: #{tpu_custom_call.1} parent=27 // pred_check
          %p177 = pneg %p69
        $region34: #{tpu_custom_call.1} parent=27 // pred_check_branch
          %179 = sbr.rel (%p177) target = $region36
        $region35: #{tpu_custom_call.1} parent=27 // pred_region
          %180 = dma.done %s173, 32768
        $region36: #{tpu_custom_call.1} parent=27 // pred_fallthru
          _
        %s181 = sand.u32 %s30, 1
        %s182 = scalar_lea.sflag [#allocation3], %s181
        %s183 = sand.u32 %s30, 1
        %s184 = smul.addr %s183, 2048
        %s185 = scalar_lea.vmem [#allocation2], %s184
        %p186 = pneg %p43
        %p187 = pneg %p40
        %s188 = sand.u32 %s56, 1
        %s189 = scalar_lea.sflag [#allocation6], %s188
        %s190 = sand.u32 %s56, 1
        %s191 = smul.addr %s190, 2048
        %s192 = scalar_lea.vmem [#allocation5], %s191
        %p193 = pneg %p69
        %p194 = pneg %p66
        %p195 = pneg %p95
        %p196 = pneg %p92
        %s197 = sand.u32 %s82, 1
        %s198 = scalar_lea.sflag [#allocation4], %s197
        %s199 = sand.u32 %s82, 1
        %s200 = smul.addr %s199, 2048
        %s201 = scalar_lea.vmem [#allocation7], %s200
        %s202 = smul.u32 256, %s22
        %s203 = smul.u32 256, %s22
        %s204 = smul.u32 256, %s22
        %v205 = vld [vmem:[%s167] sm:$0xff]
        %v206 = vld [vmem:[%s167 + $0x8] sm:$0xff]
        %v207 = vld [vmem:[%s167 + $0x10] sm:$0xff]
        %v208 = vld [vmem:[%s167 + $0x18] sm:$0xff]
        %v209 = vld [vmem:[%s167 + $0x20] sm:$0xff]
        %v210 = vld [vmem:[%s167 + $0x28] sm:$0xff]
        %v211 = vld [vmem:[%s167 + $0x30] sm:$0xff]
        %v212 = vld [vmem:[%s167 + $0x38] sm:$0xff]
        %v213 = vld [vmem:[%s167 + $0x40] sm:$0xff]
        %v214 = vld [vmem:[%s167 + $0x48] sm:$0xff]
        %v215 = vld [vmem:[%s167 + $0x50] sm:$0xff]
        %v216 = vld [vmem:[%s167 + $0x58] sm:$0xff]
        %v217 = vld [vmem:[%s167 + $0x60] sm:$0xff]
        %v218 = vld [vmem:[%s167 + $0x68] sm:$0xff]
        %v219 = vld [vmem:[%s167 + $0x70] sm:$0xff]
        %v220 = vld [vmem:[%s167 + $0x78] sm:$0xff]
        %v221 = vld [vmem:[%s167 + $0x80] sm:$0xff]
        %v222 = vld [vmem:[%s167 + $0x88] sm:$0xff]
        %v223 = vld [vmem:[%s167 + $0x90] sm:$0xff]
        %v224 = vld [vmem:[%s167 + $0x98] sm:$0xff]
        %v225 = vld [vmem:[%s167 + $0xa0] sm:$0xff]
        %v226 = vld [vmem:[%s167 + $0xa8] sm:$0xff]
        %v227 = vld [vmem:[%s167 + $0xb0] sm:$0xff]
        %v228 = vld [vmem:[%s167 + $0xb8] sm:$0xff]
        %v229 = vld [vmem:[%s167 + $0xc0] sm:$0xff]
        %v230 = vld [vmem:[%s167 + $0xc8] sm:$0xff]
        %v231 = vld [vmem:[%s167 + $0xd0] sm:$0xff]
        %v232 = vld [vmem:[%s167 + $0xd8] sm:$0xff]
        %v233 = vld [vmem:[%s167 + $0xe0] sm:$0xff]
        %v234 = vld [vmem:[%s167 + $0xe8] sm:$0xff]
        %v235 = vld [vmem:[%s167 + $0xf0] sm:$0xff]
        %v236 = vld [vmem:[%s167 + $0xf8] sm:$0xff]
        %v237 = vld [vmem:[%s167 + $0x100] sm:$0xff]
        %v238 = vld [vmem:[%s167 + $0x108] sm:$0xff]
        %v239 = vld [vmem:[%s167 + $0x110] sm:$0xff]
        %v240 = vld [vmem:[%s167 + $0x118] sm:$0xff]
        %v241 = vld [vmem:[%s167 + $0x120] sm:$0xff]
        %v242 = vld [vmem:[%s167 + $0x128] sm:$0xff]
        %v243 = vld [vmem:[%s167 + $0x130] sm:$0xff]
        %v244 = vld [vmem:[%s167 + $0x138] sm:$0xff]
        %v245 = vld [vmem:[%s167 + $0x140] sm:$0xff]
        %v246 = vld [vmem:[%s167 + $0x148] sm:$0xff]
        %v247 = vld [vmem:[%s167 + $0x150] sm:$0xff]
        %v248 = vld [vmem:[%s167 + $0x158] sm:$0xff]
        %v249 = vld [vmem:[%s167 + $0x160] sm:$0xff]
        %v250 = vld [vmem:[%s167 + $0x168] sm:$0xff]
        %v251 = vld [vmem:[%s167 + $0x170] sm:$0xff]
        %v252 = vld [vmem:[%s167 + $0x178] sm:$0xff]
        %v253 = vld [vmem:[%s167 + $0x180] sm:$0xff]
        %v254 = vld [vmem:[%s167 + $0x188] sm:$0xff]
        %v255 = vld [vmem:[%s167 + $0x190] sm:$0xff]
        %v256 = vld [vmem:[%s167 + $0x198] sm:$0xff]
        %v257 = vld [vmem:[%s167 + $0x1a0] sm:$0xff]
        %v258 = vld [vmem:[%s167 + $0x1a8] sm:$0xff]
        %v259 = vld [vmem:[%s167 + $0x1b0] sm:$0xff]
        %v260 = vld [vmem:[%s167 + $0x1b8] sm:$0xff]
        %v261 = vld [vmem:[%s167 + $0x1c0] sm:$0xff]
        %v262 = vld [vmem:[%s167 + $0x1c8] sm:$0xff]
        %v263 = vld [vmem:[%s167 + $0x1d0] sm:$0xff]
        %v264 = vld [vmem:[%s167 + $0x1d8] sm:$0xff]
        %v265 = vld [vmem:[%s167 + $0x1e0] sm:$0xff]
        %v266 = vld [vmem:[%s167 + $0x1e8] sm:$0xff]
        %v267 = vld [vmem:[%s167 + $0x1f0] sm:$0xff]
        %v268 = vld [vmem:[%s167 + $0x1f8] sm:$0xff]
        %v269 = vld [vmem:[%s167 + $0x200] sm:$0xff]
        %v270 = vld [vmem:[%s167 + $0x208] sm:$0xff]
        %v271 = vld [vmem:[%s167 + $0x210] sm:$0xff]
        %v272 = vld [vmem:[%s167 + $0x218] sm:$0xff]
        %v273 = vld [vmem:[%s167 + $0x220] sm:$0xff]
        %v274 = vld [vmem:[%s167 + $0x228] sm:$0xff]
        %v275 = vld [vmem:[%s167 + $0x230] sm:$0xff]
        %v276 = vld [vmem:[%s167 + $0x238] sm:$0xff]
        %v277 = vld [vmem:[%s167 + $0x240] sm:$0xff]
        %v278 = vld [vmem:[%s167 + $0x248] sm:$0xff]
        %v279 = vld [vmem:[%s167 + $0x250] sm:$0xff]
        %v280 = vld [vmem:[%s167 + $0x258] sm:$0xff]
        %v281 = vld [vmem:[%s167 + $0x260] sm:$0xff]
        %v282 = vld [vmem:[%s167 + $0x268] sm:$0xff]
        %v283 = vld [vmem:[%s167 + $0x270] sm:$0xff]
        %v284 = vld [vmem:[%s167 + $0x278] sm:$0xff]
        %v285 = vld [vmem:[%s167 + $0x280] sm:$0xff]
        %v286 = vld [vmem:[%s167 + $0x288] sm:$0xff]
        %v287 = vld [vmem:[%s167 + $0x290] sm:$0xff]
        %v288 = vld [vmem:[%s167 + $0x298] sm:$0xff]
        %v289 = vld [vmem:[%s167 + $0x2a0] sm:$0xff]
        %v290 = vld [vmem:[%s167 + $0x2a8] sm:$0xff]
        %v291 = vld [vmem:[%s167 + $0x2b0] sm:$0xff]
        %v292 = vld [vmem:[%s167 + $0x2b8] sm:$0xff]
        %v293 = vld [vmem:[%s167 + $0x2c0] sm:$0xff]
        %v294 = vld [vmem:[%s167 + $0x2c8] sm:$0xff]
        %v295 = vld [vmem:[%s167 + $0x2d0] sm:$0xff]
        %v296 = vld [vmem:[%s167 + $0x2d8] sm:$0xff]
        %v297 = vld [vmem:[%s167 + $0x2e0] sm:$0xff]
        %v298 = vld [vmem:[%s167 + $0x2e8] sm:$0xff]
        %v299 = vld [vmem:[%s167 + $0x2f0] sm:$0xff]
        %v300 = vld [vmem:[%s167 + $0x2f8] sm:$0xff]
        %v301 = vld [vmem:[%s167 + $0x300] sm:$0xff]
        %v302 = vld [vmem:[%s167 + $0x308] sm:$0xff]
        %v303 = vld [vmem:[%s167 + $0x310] sm:$0xff]
        %v304 = vld [vmem:[%s167 + $0x318] sm:$0xff]
        %v305 = vld [vmem:[%s167 + $0x320] sm:$0xff]
        %v306 = vld [vmem:[%s167 + $0x328] sm:$0xff]
        %v307 = vld [vmem:[%s167 + $0x330] sm:$0xff]
        %v308 = vld [vmem:[%s167 + $0x338] sm:$0xff]
        %v309 = vld [vmem:[%s167 + $0x340] sm:$0xff]
        %v310 = vld [vmem:[%s167 + $0x348] sm:$0xff]
        %v311 = vld [vmem:[%s167 + $0x350] sm:$0xff]
        %v312 = vld [vmem:[%s167 + $0x358] sm:$0xff]
        %v313 = vld [vmem:[%s167 + $0x360] sm:$0xff]
        %v314 = vld [vmem:[%s167 + $0x368] sm:$0xff]
        %v315 = vld [vmem:[%s167 + $0x370] sm:$0xff]
        %v316 = vld [vmem:[%s167 + $0x378] sm:$0xff]
        %v317 = vld [vmem:[%s167 + $0x380] sm:$0xff]
        %v318 = vld [vmem:[%s167 + $0x388] sm:$0xff]
        %v319 = vld [vmem:[%s167 + $0x390] sm:$0xff]
        %v320 = vld [vmem:[%s167 + $0x398] sm:$0xff]
        %v321 = vld [vmem:[%s167 + $0x3a0] sm:$0xff]
        %v322 = vld [vmem:[%s167 + $0x3a8] sm:$0xff]
        %v323 = vld [vmem:[%s167 + $0x3b0] sm:$0xff]
        %v324 = vld [vmem:[%s167 + $0x3b8] sm:$0xff]
        %v325 = vld [vmem:[%s167 + $0x3c0] sm:$0xff]
        %v326 = vld [vmem:[%s167 + $0x3c8] sm:$0xff]
        %v327 = vld [vmem:[%s167 + $0x3d0] sm:$0xff]
        %v328 = vld [vmem:[%s167 + $0x3d8] sm:$0xff]
        %v329 = vld [vmem:[%s167 + $0x3e0] sm:$0xff]
        %v330 = vld [vmem:[%s167 + $0x3e8] sm:$0xff]
        %v331 = vld [vmem:[%s167 + $0x3f0] sm:$0xff]
        %v332 = vld [vmem:[%s167 + $0x3f8] sm:$0xff]
        %v333 = vld [vmem:[%s167 + $0x400] sm:$0xff]
        %v334 = vld [vmem:[%s167 + $0x408] sm:$0xff]
        %v335 = vld [vmem:[%s167 + $0x410] sm:$0xff]
        %v336 = vld [vmem:[%s167 + $0x418] sm:$0xff]
        %v337 = vld [vmem:[%s167 + $0x420] sm:$0xff]
        %v338 = vld [vmem:[%s167 + $0x428] sm:$0xff]
        %v339 = vld [vmem:[%s167 + $0x430] sm:$0xff]
        %v340 = vld [vmem:[%s167 + $0x438] sm:$0xff]
        %v341 = vld [vmem:[%s167 + $0x440] sm:$0xff]
        %v342 = vld [vmem:[%s167 + $0x448] sm:$0xff]
        %v343 = vld [vmem:[%s167 + $0x450] sm:$0xff]
        %v344 = vld [vmem:[%s167 + $0x458] sm:$0xff]
        %v345 = vld [vmem:[%s167 + $0x460] sm:$0xff]
        %v346 = vld [vmem:[%s167 + $0x468] sm:$0xff]
        %v347 = vld [vmem:[%s167 + $0x470] sm:$0xff]
        %v348 = vld [vmem:[%s167 + $0x478] sm:$0xff]
        %v349 = vld [vmem:[%s167 + $0x480] sm:$0xff]
        %v350 = vld [vmem:[%s167 + $0x488] sm:$0xff]
        %v351 = vld [vmem:[%s167 + $0x490] sm:$0xff]
        %v352 = vld [vmem:[%s167 + $0x498] sm:$0xff]
        %v353 = vld [vmem:[%s167 + $0x4a0] sm:$0xff]
        %v354 = vld [vmem:[%s167 + $0x4a8] sm:$0xff]
        %v355 = vld [vmem:[%s167 + $0x4b0] sm:$0xff]
        %v356 = vld [vmem:[%s167 + $0x4b8] sm:$0xff]
        %v357 = vld [vmem:[%s167 + $0x4c0] sm:$0xff]
        %v358 = vld [vmem:[%s167 + $0x4c8] sm:$0xff]
        %v359 = vld [vmem:[%s167 + $0x4d0] sm:$0xff]
        %v360 = vld [vmem:[%s167 + $0x4d8] sm:$0xff]
        %v361 = vld [vmem:[%s167 + $0x4e0] sm:$0xff]
        %v362 = vld [vmem:[%s167 + $0x4e8] sm:$0xff]
        %v363 = vld [vmem:[%s167 + $0x4f0] sm:$0xff]
        %v364 = vld [vmem:[%s167 + $0x4f8] sm:$0xff]
        %v365 = vld [vmem:[%s167 + $0x500] sm:$0xff]
        %v366 = vld [vmem:[%s167 + $0x508] sm:$0xff]
        %v367 = vld [vmem:[%s167 + $0x510] sm:$0xff]
        %v368 = vld [vmem:[%s167 + $0x518] sm:$0xff]
        %v369 = vld [vmem:[%s167 + $0x520] sm:$0xff]
        %v370 = vld [vmem:[%s167 + $0x528] sm:$0xff]
        %v371 = vld [vmem:[%s167 + $0x530] sm:$0xff]
        %v372 = vld [vmem:[%s167 + $0x538] sm:$0xff]
        %v373 = vld [vmem:[%s167 + $0x540] sm:$0xff]
        %v374 = vld [vmem:[%s167 + $0x548] sm:$0xff]
        %v375 = vld [vmem:[%s167 + $0x550] sm:$0xff]
        %v376 = vld [vmem:[%s167 + $0x558] sm:$0xff]
        %v377 = vld [vmem:[%s167 + $0x560] sm:$0xff]
        %v378 = vld [vmem:[%s167 + $0x568] sm:$0xff]
        %v379 = vld [vmem:[%s167 + $0x570] sm:$0xff]
        %v380 = vld [vmem:[%s167 + $0x578] sm:$0xff]
        %v381 = vld [vmem:[%s167 + $0x580] sm:$0xff]
        %v382 = vld [vmem:[%s167 + $0x588] sm:$0xff]
        %v383 = vld [vmem:[%s167 + $0x590] sm:$0xff]
        %v384 = vld [vmem:[%s167 + $0x598] sm:$0xff]
        %v385 = vld [vmem:[%s167 + $0x5a0] sm:$0xff]
        %v386 = vld [vmem:[%s167 + $0x5a8] sm:$0xff]
        %v387 = vld [vmem:[%s167 + $0x5b0] sm:$0xff]
        %v388 = vld [vmem:[%s167 + $0x5b8] sm:$0xff]
        %v389 = vld [vmem:[%s167 + $0x5c0] sm:$0xff]
        %v390 = vld [vmem:[%s167 + $0x5c8] sm:$0xff]
        %v391 = vld [vmem:[%s167 + $0x5d0] sm:$0xff]
        %v392 = vld [vmem:[%s167 + $0x5d8] sm:$0xff]
        %v393 = vld [vmem:[%s167 + $0x5e0] sm:$0xff]
        %v394 = vld [vmem:[%s167 + $0x5e8] sm:$0xff]
        %v395 = vld [vmem:[%s167 + $0x5f0] sm:$0xff]
        %v396 = vld [vmem:[%s167 + $0x5f8] sm:$0xff]
        %v397 = vld [vmem:[%s167 + $0x600] sm:$0xff]
        %v398 = vld [vmem:[%s167 + $0x608] sm:$0xff]
        %v399 = vld [vmem:[%s167 + $0x610] sm:$0xff]
        %v400 = vld [vmem:[%s167 + $0x618] sm:$0xff]
        %v401 = vld [vmem:[%s167 + $0x620] sm:$0xff]
        %v402 = vld [vmem:[%s167 + $0x628] sm:$0xff]
        %v403 = vld [vmem:[%s167 + $0x630] sm:$0xff]
        %v404 = vld [vmem:[%s167 + $0x638] sm:$0xff]
        %v405 = vld [vmem:[%s167 + $0x640] sm:$0xff]
        %v406 = vld [vmem:[%s167 + $0x648] sm:$0xff]
        %v407 = vld [vmem:[%s167 + $0x650] sm:$0xff]
        %v408 = vld [vmem:[%s167 + $0x658] sm:$0xff]
        %v409 = vld [vmem:[%s167 + $0x660] sm:$0xff]
        %v410 = vld [vmem:[%s167 + $0x668] sm:$0xff]
        %v411 = vld [vmem:[%s167 + $0x670] sm:$0xff]
        %v412 = vld [vmem:[%s167 + $0x678] sm:$0xff]
        %v413 = vld [vmem:[%s167 + $0x680] sm:$0xff]
        %v414 = vld [vmem:[%s167 + $0x688] sm:$0xff]
        %v415 = vld [vmem:[%s167 + $0x690] sm:$0xff]
        %v416 = vld [vmem:[%s167 + $0x698] sm:$0xff]
        %v417 = vld [vmem:[%s167 + $0x6a0] sm:$0xff]
        %v418 = vld [vmem:[%s167 + $0x6a8] sm:$0xff]
        %v419 = vld [vmem:[%s167 + $0x6b0] sm:$0xff]
        %v420 = vld [vmem:[%s167 + $0x6b8] sm:$0xff]
        %v421 = vld [vmem:[%s167 + $0x6c0] sm:$0xff]
        %v422 = vld [vmem:[%s167 + $0x6c8] sm:$0xff]
        %v423 = vld [vmem:[%s167 + $0x6d0] sm:$0xff]
        %v424 = vld [vmem:[%s167 + $0x6d8] sm:$0xff]
        %v425 = vld [vmem:[%s167 + $0x6e0] sm:$0xff]
        %v426 = vld [vmem:[%s167 + $0x6e8] sm:$0xff]
        %v427 = vld [vmem:[%s167 + $0x6f0] sm:$0xff]
        %v428 = vld [vmem:[%s167 + $0x6f8] sm:$0xff]
        %v429 = vld [vmem:[%s167 + $0x700] sm:$0xff]
        %v430 = vld [vmem:[%s167 + $0x708] sm:$0xff]
        %v431 = vld [vmem:[%s167 + $0x710] sm:$0xff]
        %v432 = vld [vmem:[%s167 + $0x718] sm:$0xff]
        %v433 = vld [vmem:[%s167 + $0x720] sm:$0xff]
        %v434 = vld [vmem:[%s167 + $0x728] sm:$0xff]
        %v435 = vld [vmem:[%s167 + $0x730] sm:$0xff]
        %v436 = vld [vmem:[%s167 + $0x738] sm:$0xff]
        %v437 = vld [vmem:[%s167 + $0x740] sm:$0xff]
        %v438 = vld [vmem:[%s167 + $0x748] sm:$0xff]
        %v439 = vld [vmem:[%s167 + $0x750] sm:$0xff]
        %v440 = vld [vmem:[%s167 + $0x758] sm:$0xff]
        %v441 = vld [vmem:[%s167 + $0x760] sm:$0xff]
        %v442 = vld [vmem:[%s167 + $0x768] sm:$0xff]
        %v443 = vld [vmem:[%s167 + $0x770] sm:$0xff]
        %v444 = vld [vmem:[%s167 + $0x778] sm:$0xff]
        %v445 = vld [vmem:[%s167 + $0x780] sm:$0xff]
        %v446 = vld [vmem:[%s167 + $0x788] sm:$0xff]
        %v447 = vld [vmem:[%s167 + $0x790] sm:$0xff]
        %v448 = vld [vmem:[%s167 + $0x798] sm:$0xff]
        %v449 = vld [vmem:[%s167 + $0x7a0] sm:$0xff]
        %v450 = vld [vmem:[%s167 + $0x7a8] sm:$0xff]
        %v451 = vld [vmem:[%s167 + $0x7b0] sm:$0xff]
        %v452 = vld [vmem:[%s167 + $0x7b8] sm:$0xff]
        %v453 = vld [vmem:[%s167 + $0x7c0] sm:$0xff]
        %v454 = vld [vmem:[%s167 + $0x7c8] sm:$0xff]
        %v455 = vld [vmem:[%s167 + $0x7d0] sm:$0xff]
        %v456 = vld [vmem:[%s167 + $0x7d8] sm:$0xff]
        %v457 = vld [vmem:[%s167 + $0x7e0] sm:$0xff]
        %v458 = vld [vmem:[%s167 + $0x7e8] sm:$0xff]
        %v459 = vld [vmem:[%s167 + $0x7f0] sm:$0xff]
        %v460 = vld [vmem:[%s167 + $0x7f8] sm:$0xff]
        %v461 = vld [vmem:[%s176] sm:$0xff]
        %v462 = vld [vmem:[%s176 + $0x8] sm:$0xff]
        %v463 = vld [vmem:[%s176 + $0x10] sm:$0xff]
        %v464 = vld [vmem:[%s176 + $0x18] sm:$0xff]
        %v465 = vld [vmem:[%s176 + $0x20] sm:$0xff]
        %v466 = vld [vmem:[%s176 + $0x28] sm:$0xff]
        %v467 = vld [vmem:[%s176 + $0x30] sm:$0xff]
        %v468 = vld [vmem:[%s176 + $0x38] sm:$0xff]
        %v469 = vld [vmem:[%s176 + $0x40] sm:$0xff]
        %v470 = vld [vmem:[%s176 + $0x48] sm:$0xff]
        %v471 = vld [vmem:[%s176 + $0x50] sm:$0xff]
        %v472 = vld [vmem:[%s176 + $0x58] sm:$0xff]
        %v473 = vld [vmem:[%s176 + $0x60] sm:$0xff]
        %v474 = vld [vmem:[%s176 + $0x68] sm:$0xff]
        %v475 = vld [vmem:[%s176 + $0x70] sm:$0xff]
        %v476 = vld [vmem:[%s176 + $0x78] sm:$0xff]
        %v477 = vld [vmem:[%s176 + $0x80] sm:$0xff]
        %v478 = vld [vmem:[%s176 + $0x88] sm:$0xff]
        %v479 = vld [vmem:[%s176 + $0x90] sm:$0xff]
        %v480 = vld [vmem:[%s176 + $0x98] sm:$0xff]
        %v481 = vld [vmem:[%s176 + $0xa0] sm:$0xff]
        %v482 = vld [vmem:[%s176 + $0xa8] sm:$0xff]
        %v483 = vld [vmem:[%s176 + $0xb0] sm:$0xff]
        %v484 = vld [vmem:[%s176 + $0xb8] sm:$0xff]
        %v485 = vld [vmem:[%s176 + $0xc0] sm:$0xff]
        %v486 = vld [vmem:[%s176 + $0xc8] sm:$0xff]
        %v487 = vld [vmem:[%s176 + $0xd0] sm:$0xff]
        %v488 = vld [vmem:[%s176 + $0xd8] sm:$0xff]
        %v489 = vld [vmem:[%s176 + $0xe0] sm:$0xff]
        %v490 = vld [vmem:[%s176 + $0xe8] sm:$0xff]
        %v491 = vld [vmem:[%s176 + $0xf0] sm:$0xff]
        %v492 = vld [vmem:[%s176 + $0xf8] sm:$0xff]
        %v493 = vld [vmem:[%s176 + $0x100] sm:$0xff]
        %v494 = vld [vmem:[%s176 + $0x108] sm:$0xff]
        %v495 = vld [vmem:[%s176 + $0x110] sm:$0xff]
        %v496 = vld [vmem:[%s176 + $0x118] sm:$0xff]
        %v497 = vld [vmem:[%s176 + $0x120] sm:$0xff]
        %v498 = vld [vmem:[%s176 + $0x128] sm:$0xff]
        %v499 = vld [vmem:[%s176 + $0x130] sm:$0xff]
        %v500 = vld [vmem:[%s176 + $0x138] sm:$0xff]
        %v501 = vld [vmem:[%s176 + $0x140] sm:$0xff]
        %v502 = vld [vmem:[%s176 + $0x148] sm:$0xff]
        %v503 = vld [vmem:[%s176 + $0x150] sm:$0xff]
        %v504 = vld [vmem:[%s176 + $0x158] sm:$0xff]
        %v505 = vld [vmem:[%s176 + $0x160] sm:$0xff]
        %v506 = vld [vmem:[%s176 + $0x168] sm:$0xff]
        %v507 = vld [vmem:[%s176 + $0x170] sm:$0xff]
        %v508 = vld [vmem:[%s176 + $0x178] sm:$0xff]
        %v509 = vld [vmem:[%s176 + $0x180] sm:$0xff]
        %v510 = vld [vmem:[%s176 + $0x188] sm:$0xff]
        %v511 = vld [vmem:[%s176 + $0x190] sm:$0xff]
        %v512 = vld [vmem:[%s176 + $0x198] sm:$0xff]
        %v513 = vld [vmem:[%s176 + $0x1a0] sm:$0xff]
        %v514 = vld [vmem:[%s176 + $0x1a8] sm:$0xff]
        %v515 = vld [vmem:[%s176 + $0x1b0] sm:$0xff]
        %v516 = vld [vmem:[%s176 + $0x1b8] sm:$0xff]
        %v517 = vld [vmem:[%s176 + $0x1c0] sm:$0xff]
        %v518 = vld [vmem:[%s176 + $0x1c8] sm:$0xff]
        %v519 = vld [vmem:[%s176 + $0x1d0] sm:$0xff]
        %v520 = vld [vmem:[%s176 + $0x1d8] sm:$0xff]
        %v521 = vld [vmem:[%s176 + $0x1e0] sm:$0xff]
        %v522 = vld [vmem:[%s176 + $0x1e8] sm:$0xff]
        %v523 = vld [vmem:[%s176 + $0x1f0] sm:$0xff]
        %v524 = vld [vmem:[%s176 + $0x1f8] sm:$0xff]
        %v525 = vld [vmem:[%s176 + $0x200] sm:$0xff]
        %v526 = vld [vmem:[%s176 + $0x208] sm:$0xff]
        %v527 = vld [vmem:[%s176 + $0x210] sm:$0xff]
        %v528 = vld [vmem:[%s176 + $0x218] sm:$0xff]
        %v529 = vld [vmem:[%s176 + $0x220] sm:$0xff]
        %v530 = vld [vmem:[%s176 + $0x228] sm:$0xff]
        %v531 = vld [vmem:[%s176 + $0x230] sm:$0xff]
        %v532 = vld [vmem:[%s176 + $0x238] sm:$0xff]
        %v533 = vld [vmem:[%s176 + $0x240] sm:$0xff]
        %v534 = vld [vmem:[%s176 + $0x248] sm:$0xff]
        %v535 = vld [vmem:[%s176 + $0x250] sm:$0xff]
        %v536 = vld [vmem:[%s176 + $0x258] sm:$0xff]
        %v537 = vld [vmem:[%s176 + $0x260] sm:$0xff]
        %v538 = vld [vmem:[%s176 + $0x268] sm:$0xff]
        %v539 = vld [vmem:[%s176 + $0x270] sm:$0xff]
        %v540 = vld [vmem:[%s176 + $0x278] sm:$0xff]
        %v541 = vld [vmem:[%s176 + $0x280] sm:$0xff]
        %v542 = vld [vmem:[%s176 + $0x288] sm:$0xff]
        %v543 = vld [vmem:[%s176 + $0x290] sm:$0xff]
        %v544 = vld [vmem:[%s176 + $0x298] sm:$0xff]
        %v545 = vld [vmem:[%s176 + $0x2a0] sm:$0xff]
        %v546 = vld [vmem:[%s176 + $0x2a8] sm:$0xff]
        %v547 = vld [vmem:[%s176 + $0x2b0] sm:$0xff]
        %v548 = vld [vmem:[%s176 + $0x2b8] sm:$0xff]
        %v549 = vld [vmem:[%s176 + $0x2c0] sm:$0xff]
        %v550 = vld [vmem:[%s176 + $0x2c8] sm:$0xff]
        %v551 = vld [vmem:[%s176 + $0x2d0] sm:$0xff]
        %v552 = vld [vmem:[%s176 + $0x2d8] sm:$0xff]
        %v553 = vld [vmem:[%s176 + $0x2e0] sm:$0xff]
        %v554 = vld [vmem:[%s176 + $0x2e8] sm:$0xff]
        %v555 = vld [vmem:[%s176 + $0x2f0] sm:$0xff]
        %v556 = vld [vmem:[%s176 + $0x2f8] sm:$0xff]
        %v557 = vld [vmem:[%s176 + $0x300] sm:$0xff]
        %v558 = vld [vmem:[%s176 + $0x308] sm:$0xff]
        %v559 = vld [vmem:[%s176 + $0x310] sm:$0xff]
        %v560 = vld [vmem:[%s176 + $0x318] sm:$0xff]
        %v561 = vld [vmem:[%s176 + $0x320] sm:$0xff]
        %v562 = vld [vmem:[%s176 + $0x328] sm:$0xff]
        %v563 = vld [vmem:[%s176 + $0x330] sm:$0xff]
        %v564 = vld [vmem:[%s176 + $0x338] sm:$0xff]
        %v565 = vld [vmem:[%s176 + $0x340] sm:$0xff]
        %v566 = vld [vmem:[%s176 + $0x348] sm:$0xff]
        %v567 = vld [vmem:[%s176 + $0x350] sm:$0xff]
        %v568 = vld [vmem:[%s176 + $0x358] sm:$0xff]
        %v569 = vld [vmem:[%s176 + $0x360] sm:$0xff]
        %v570 = vld [vmem:[%s176 + $0x368] sm:$0xff]
        %v571 = vld [vmem:[%s176 + $0x370] sm:$0xff]
        %v572 = vld [vmem:[%s176 + $0x378] sm:$0xff]
        %v573 = vld [vmem:[%s176 + $0x380] sm:$0xff]
        %v574 = vld [vmem:[%s176 + $0x388] sm:$0xff]
        %v575 = vld [vmem:[%s176 + $0x390] sm:$0xff]
        %v576 = vld [vmem:[%s176 + $0x398] sm:$0xff]
        %v577 = vld [vmem:[%s176 + $0x3a0] sm:$0xff]
        %v578 = vld [vmem:[%s176 + $0x3a8] sm:$0xff]
        %v579 = vld [vmem:[%s176 + $0x3b0] sm:$0xff]
        %v580 = vld [vmem:[%s176 + $0x3b8] sm:$0xff]
        %v581 = vld [vmem:[%s176 + $0x3c0] sm:$0xff]
        %v582 = vld [vmem:[%s176 + $0x3c8] sm:$0xff]
        %v583 = vld [vmem:[%s176 + $0x3d0] sm:$0xff]
        %v584 = vld [vmem:[%s176 + $0x3d8] sm:$0xff]
        %v585 = vld [vmem:[%s176 + $0x3e0] sm:$0xff]
        %v586 = vld [vmem:[%s176 + $0x3e8] sm:$0xff]
        %v587 = vld [vmem:[%s176 + $0x3f0] sm:$0xff]
        %v588 = vld [vmem:[%s176 + $0x3f8] sm:$0xff]
        %v589 = vld [vmem:[%s176 + $0x400] sm:$0xff]
        %v590 = vld [vmem:[%s176 + $0x408] sm:$0xff]
        %v591 = vld [vmem:[%s176 + $0x410] sm:$0xff]
        %v592 = vld [vmem:[%s176 + $0x418] sm:$0xff]
        %v593 = vld [vmem:[%s176 + $0x420] sm:$0xff]
        %v594 = vld [vmem:[%s176 + $0x428] sm:$0xff]
        %v595 = vld [vmem:[%s176 + $0x430] sm:$0xff]
        %v596 = vld [vmem:[%s176 + $0x438] sm:$0xff]
        %v597 = vld [vmem:[%s176 + $0x440] sm:$0xff]
        %v598 = vld [vmem:[%s176 + $0x448] sm:$0xff]
        %v599 = vld [vmem:[%s176 + $0x450] sm:$0xff]
        %v600 = vld [vmem:[%s176 + $0x458] sm:$0xff]
        %v601 = vld [vmem:[%s176 + $0x460] sm:$0xff]
        %v602 = vld [vmem:[%s176 + $0x468] sm:$0xff]
        %v603 = vld [vmem:[%s176 + $0x470] sm:$0xff]
        %v604 = vld [vmem:[%s176 + $0x478] sm:$0xff]
        %v605 = vld [vmem:[%s176 + $0x480] sm:$0xff]
        %v606 = vld [vmem:[%s176 + $0x488] sm:$0xff]
        %v607 = vld [vmem:[%s176 + $0x490] sm:$0xff]
        %v608 = vld [vmem:[%s176 + $0x498] sm:$0xff]
        %v609 = vld [vmem:[%s176 + $0x4a0] sm:$0xff]
        %v610 = vld [vmem:[%s176 + $0x4a8] sm:$0xff]
        %v611 = vld [vmem:[%s176 + $0x4b0] sm:$0xff]
        %v612 = vld [vmem:[%s176 + $0x4b8] sm:$0xff]
        %v613 = vld [vmem:[%s176 + $0x4c0] sm:$0xff]
        %v614 = vld [vmem:[%s176 + $0x4c8] sm:$0xff]
        %v615 = vld [vmem:[%s176 + $0x4d0] sm:$0xff]
        %v616 = vld [vmem:[%s176 + $0x4d8] sm:$0xff]
        %v617 = vld [vmem:[%s176 + $0x4e0] sm:$0xff]
        %v618 = vld [vmem:[%s176 + $0x4e8] sm:$0xff]
        %v619 = vld [vmem:[%s176 + $0x4f0] sm:$0xff]
        %v620 = vld [vmem:[%s176 + $0x4f8] sm:$0xff]
        %v621 = vld [vmem:[%s176 + $0x500] sm:$0xff]
        %v622 = vld [vmem:[%s176 + $0x508] sm:$0xff]
        %v623 = vld [vmem:[%s176 + $0x510] sm:$0xff]
        %v624 = vld [vmem:[%s176 + $0x518] sm:$0xff]
        %v625 = vld [vmem:[%s176 + $0x520] sm:$0xff]
        %v626 = vld [vmem:[%s176 + $0x528] sm:$0xff]
        %v627 = vld [vmem:[%s176 + $0x530] sm:$0xff]
        %v628 = vld [vmem:[%s176 + $0x538] sm:$0xff]
        %v629 = vld [vmem:[%s176 + $0x540] sm:$0xff]
        %v630 = vld [vmem:[%s176 + $0x548] sm:$0xff]
        %v631 = vld [vmem:[%s176 + $0x550] sm:$0xff]
        %v632 = vld [vmem:[%s176 + $0x558] sm:$0xff]
        %v633 = vld [vmem:[%s176 + $0x560] sm:$0xff]
        %v634 = vld [vmem:[%s176 + $0x568] sm:$0xff]
        %v635 = vld [vmem:[%s176 + $0x570] sm:$0xff]
        %v636 = vld [vmem:[%s176 + $0x578] sm:$0xff]
        %v637 = vld [vmem:[%s176 + $0x580] sm:$0xff]
        %v638 = vld [vmem:[%s176 + $0x588] sm:$0xff]
        %v639 = vld [vmem:[%s176 + $0x590] sm:$0xff]
        %v640 = vld [vmem:[%s176 + $0x598] sm:$0xff]
        %v641 = vld [vmem:[%s176 + $0x5a0] sm:$0xff]
        %v642 = vld [vmem:[%s176 + $0x5a8] sm:$0xff]
        %v643 = vld [vmem:[%s176 + $0x5b0] sm:$0xff]
        %v644 = vld [vmem:[%s176 + $0x5b8] sm:$0xff]
        %v645 = vld [vmem:[%s176 + $0x5c0] sm:$0xff]
        %v646 = vld [vmem:[%s176 + $0x5c8] sm:$0xff]
        %v647 = vld [vmem:[%s176 + $0x5d0] sm:$0xff]
        %v648 = vld [vmem:[%s176 + $0x5d8] sm:$0xff]
        %v649 = vld [vmem:[%s176 + $0x5e0] sm:$0xff]
        %v650 = vld [vmem:[%s176 + $0x5e8] sm:$0xff]
        %v651 = vld [vmem:[%s176 + $0x5f0] sm:$0xff]
        %v652 = vld [vmem:[%s176 + $0x5f8] sm:$0xff]
        %v653 = vld [vmem:[%s176 + $0x600] sm:$0xff]
        %v654 = vld [vmem:[%s176 + $0x608] sm:$0xff]
        %v655 = vld [vmem:[%s176 + $0x610] sm:$0xff]
        %v656 = vld [vmem:[%s176 + $0x618] sm:$0xff]
        %v657 = vld [vmem:[%s176 + $0x620] sm:$0xff]
        %v658 = vld [vmem:[%s176 + $0x628] sm:$0xff]
        %v659 = vld [vmem:[%s176 + $0x630] sm:$0xff]
        %v660 = vld [vmem:[%s176 + $0x638] sm:$0xff]
        %v661 = vld [vmem:[%s176 + $0x640] sm:$0xff]
        %v662 = vld [vmem:[%s176 + $0x648] sm:$0xff]
        %v663 = vld [vmem:[%s176 + $0x650] sm:$0xff]
        %v664 = vld [vmem:[%s176 + $0x658] sm:$0xff]
        %v665 = vld [vmem:[%s176 + $0x660] sm:$0xff]
        %v666 = vld [vmem:[%s176 + $0x668] sm:$0xff]
        %v667 = vld [vmem:[%s176 + $0x670] sm:$0xff]
        %v668 = vld [vmem:[%s176 + $0x678] sm:$0xff]
        %v669 = vld [vmem:[%s176 + $0x680] sm:$0xff]
        %v670 = vld [vmem:[%s176 + $0x688] sm:$0xff]
        %v671 = vld [vmem:[%s176 + $0x690] sm:$0xff]
        %v672 = vld [vmem:[%s176 + $0x698] sm:$0xff]
        %v673 = vld [vmem:[%s176 + $0x6a0] sm:$0xff]
        %v674 = vld [vmem:[%s176 + $0x6a8] sm:$0xff]
        %v675 = vld [vmem:[%s176 + $0x6b0] sm:$0xff]
        %v676 = vld [vmem:[%s176 + $0x6b8] sm:$0xff]
        %v677 = vld [vmem:[%s176 + $0x6c0] sm:$0xff]
        %v678 = vld [vmem:[%s176 + $0x6c8] sm:$0xff]
        %v679 = vld [vmem:[%s176 + $0x6d0] sm:$0xff]
        %v680 = vld [vmem:[%s176 + $0x6d8] sm:$0xff]
        %v681 = vld [vmem:[%s176 + $0x6e0] sm:$0xff]
        %v682 = vld [vmem:[%s176 + $0x6e8] sm:$0xff]
        %v683 = vld [vmem:[%s176 + $0x6f0] sm:$0xff]
        %v684 = vld [vmem:[%s176 + $0x6f8] sm:$0xff]
        %v685 = vld [vmem:[%s176 + $0x700] sm:$0xff]
        %v686 = vld [vmem:[%s176 + $0x708] sm:$0xff]
        %v687 = vld [vmem:[%s176 + $0x710] sm:$0xff]
        %v688 = vld [vmem:[%s176 + $0x718] sm:$0xff]
        %v689 = vld [vmem:[%s176 + $0x720] sm:$0xff]
        %v690 = vld [vmem:[%s176 + $0x728] sm:$0xff]
        %v691 = vld [vmem:[%s176 + $0x730] sm:$0xff]
        %v692 = vld [vmem:[%s176 + $0x738] sm:$0xff]
        %v693 = vld [vmem:[%s176 + $0x740] sm:$0xff]
        %v694 = vld [vmem:[%s176 + $0x748] sm:$0xff]
        %v695 = vld [vmem:[%s176 + $0x750] sm:$0xff]
        %v696 = vld [vmem:[%s176 + $0x758] sm:$0xff]
        %v697 = vld [vmem:[%s176 + $0x760] sm:$0xff]
        %v698 = vld [vmem:[%s176 + $0x768] sm:$0xff]
        %v699 = vld [vmem:[%s176 + $0x770] sm:$0xff]
        %v700 = vld [vmem:[%s176 + $0x778] sm:$0xff]
        %v701 = vld [vmem:[%s176 + $0x780] sm:$0xff]
        %v702 = vld [vmem:[%s176 + $0x788] sm:$0xff]
        %v703 = vld [vmem:[%s176 + $0x790] sm:$0xff]
        %v704 = vld [vmem:[%s176 + $0x798] sm:$0xff]
        %v705 = vld [vmem:[%s176 + $0x7a0] sm:$0xff]
        %v706 = vld [vmem:[%s176 + $0x7a8] sm:$0xff]
        %v707 = vld [vmem:[%s176 + $0x7b0] sm:$0xff]
        %v708 = vld [vmem:[%s176 + $0x7b8] sm:$0xff]
        %v709 = vld [vmem:[%s176 + $0x7c0] sm:$0xff]
        %v710 = vld [vmem:[%s176 + $0x7c8] sm:$0xff]
        %v711 = vld [vmem:[%s176 + $0x7d0] sm:$0xff]
        %v712 = vld [vmem:[%s176 + $0x7d8] sm:$0xff]
        %v713 = vld [vmem:[%s176 + $0x7e0] sm:$0xff]
        %v714 = vld [vmem:[%s176 + $0x7e8] sm:$0xff]
        %v715 = vld [vmem:[%s176 + $0x7f0] sm:$0xff]
        %v716 = vld [vmem:[%s176 + $0x7f8] sm:$0xff]
        %v717 = vadd.f32 %v205, %v461
        %v718 = vadd.f32 %v206, %v462
        %v719 = vadd.f32 %v207, %v463
        %v720 = vadd.f32 %v208, %v464
        %v721 = vadd.f32 %v209, %v465
        %v722 = vadd.f32 %v210, %v466
        %v723 = vadd.f32 %v211, %v467
        %v724 = vadd.f32 %v212, %v468
        %v725 = vadd.f32 %v213, %v469
        %v726 = vadd.f32 %v214, %v470
        %v727 = vadd.f32 %v215, %v471
        %v728 = vadd.f32 %v216, %v472
        %v729 = vadd.f32 %v217, %v473
        %v730 = vadd.f32 %v218, %v474
        %v731 = vadd.f32 %v219, %v475
        %v732 = vadd.f32 %v220, %v476
        %v733 = vadd.f32 %v221, %v477
        %v734 = vadd.f32 %v222, %v478
        %v735 = vadd.f32 %v223, %v479
        %v736 = vadd.f32 %v224, %v480
        %v737 = vadd.f32 %v225, %v481
        %v738 = vadd.f32 %v226, %v482
        %v739 = vadd.f32 %v227, %v483
        %v740 = vadd.f32 %v228, %v484
        %v741 = vadd.f32 %v229, %v485
        %v742 = vadd.f32 %v230, %v486
        %v743 = vadd.f32 %v231, %v487
        %v744 = vadd.f32 %v232, %v488
        %v745 = vadd.f32 %v233, %v489
        %v746 = vadd.f32 %v234, %v490
        %v747 = vadd.f32 %v235, %v491
        %v748 = vadd.f32 %v236, %v492
        %v749 = vadd.f32 %v237, %v493
        %v750 = vadd.f32 %v238, %v494
        %v751 = vadd.f32 %v239, %v495
        %v752 = vadd.f32 %v240, %v496
        %v753 = vadd.f32 %v241, %v497
        %v754 = vadd.f32 %v242, %v498
        %v755 = vadd.f32 %v243, %v499
        %v756 = vadd.f32 %v244, %v500
        %v757 = vadd.f32 %v245, %v501
        %v758 = vadd.f32 %v246, %v502
        %v759 = vadd.f32 %v247, %v503
        %v760 = vadd.f32 %v248, %v504
        %v761 = vadd.f32 %v249, %v505
        %v762 = vadd.f32 %v250, %v506
        %v763 = vadd.f32 %v251, %v507
        %v764 = vadd.f32 %v252, %v508
        %v765 = vadd.f32 %v253, %v509
        %v766 = vadd.f32 %v254, %v510
        %v767 = vadd.f32 %v255, %v511
        %v768 = vadd.f32 %v256, %v512
        %v769 = vadd.f32 %v257, %v513
        %v770 = vadd.f32 %v258, %v514
        %v771 = vadd.f32 %v259, %v515
        %v772 = vadd.f32 %v260, %v516
        %v773 = vadd.f32 %v261, %v517
        %v774 = vadd.f32 %v262, %v518
        %v775 = vadd.f32 %v263, %v519
        %v776 = vadd.f32 %v264, %v520
        %v777 = vadd.f32 %v265, %v521
        %v778 = vadd.f32 %v266, %v522
        %v779 = vadd.f32 %v267, %v523
        %v780 = vadd.f32 %v268, %v524
        %v781 = vadd.f32 %v269, %v525
        %v782 = vadd.f32 %v270, %v526
        %v783 = vadd.f32 %v271, %v527
        %v784 = vadd.f32 %v272, %v528
        %v785 = vadd.f32 %v273, %v529
        %v786 = vadd.f32 %v274, %v530
        %v787 = vadd.f32 %v275, %v531
        %v788 = vadd.f32 %v276, %v532
        %v789 = vadd.f32 %v277, %v533
        %v790 = vadd.f32 %v278, %v534
        %v791 = vadd.f32 %v279, %v535
        %v792 = vadd.f32 %v280, %v536
        %v793 = vadd.f32 %v281, %v537
        %v794 = vadd.f32 %v282, %v538
        %v795 = vadd.f32 %v283, %v539
        %v796 = vadd.f32 %v284, %v540
        %v797 = vadd.f32 %v285, %v541
        %v798 = vadd.f32 %v286, %v542
        %v799 = vadd.f32 %v287, %v543
        %v800 = vadd.f32 %v288, %v544
        %v801 = vadd.f32 %v289, %v545
        %v802 = vadd.f32 %v290, %v546
        %v803 = vadd.f32 %v291, %v547
        %v804 = vadd.f32 %v292, %v548
        %v805 = vadd.f32 %v293, %v549
        %v806 = vadd.f32 %v294, %v550
        %v807 = vadd.f32 %v295, %v551
        %v808 = vadd.f32 %v296, %v552
        %v809 = vadd.f32 %v297, %v553
        %v810 = vadd.f32 %v298, %v554
        %v811 = vadd.f32 %v299, %v555
        %v812 = vadd.f32 %v300, %v556
        %v813 = vadd.f32 %v301, %v557
        %v814 = vadd.f32 %v302, %v558
        %v815 = vadd.f32 %v303, %v559
        %v816 = vadd.f32 %v304, %v560
        %v817 = vadd.f32 %v305, %v561
        %v818 = vadd.f32 %v306, %v562
        %v819 = vadd.f32 %v307, %v563
        %v820 = vadd.f32 %v308, %v564
        %v821 = vadd.f32 %v309, %v565
        %v822 = vadd.f32 %v310, %v566
        %v823 = vadd.f32 %v311, %v567
        %v824 = vadd.f32 %v312, %v568
        %v825 = vadd.f32 %v313, %v569
        %v826 = vadd.f32 %v314, %v570
        %v827 = vadd.f32 %v315, %v571
        %v828 = vadd.f32 %v316, %v572
        %v829 = vadd.f32 %v317, %v573
        %v830 = vadd.f32 %v318, %v574
        %v831 = vadd.f32 %v319, %v575
        %v832 = vadd.f32 %v320, %v576
        %v833 = vadd.f32 %v321, %v577
        %v834 = vadd.f32 %v322, %v578
        %v835 = vadd.f32 %v323, %v579
        %v836 = vadd.f32 %v324, %v580
        %v837 = vadd.f32 %v325, %v581
        %v838 = vadd.f32 %v326, %v582
        %v839 = vadd.f32 %v327, %v583
        %v840 = vadd.f32 %v328, %v584
        %v841 = vadd.f32 %v329, %v585
        %v842 = vadd.f32 %v330, %v586
        %v843 = vadd.f32 %v331, %v587
        %v844 = vadd.f32 %v332, %v588
        %v845 = vadd.f32 %v333, %v589
        %v846 = vadd.f32 %v334, %v590
        %v847 = vadd.f32 %v335, %v591
        %v848 = vadd.f32 %v336, %v592
        %v849 = vadd.f32 %v337, %v593
        %v850 = vadd.f32 %v338, %v594
        %v851 = vadd.f32 %v339, %v595
        %v852 = vadd.f32 %v340, %v596
        %v853 = vadd.f32 %v341, %v597
        %v854 = vadd.f32 %v342, %v598
        %v855 = vadd.f32 %v343, %v599
        %v856 = vadd.f32 %v344, %v600
        %v857 = vadd.f32 %v345, %v601
        %v858 = vadd.f32 %v346, %v602
        %v859 = vadd.f32 %v347, %v603
        %v860 = vadd.f32 %v348, %v604
        %v861 = vadd.f32 %v349, %v605
        %v862 = vadd.f32 %v350, %v606
        %v863 = vadd.f32 %v351, %v607
        %v864 = vadd.f32 %v352, %v608
        %v865 = vadd.f32 %v353, %v609
        %v866 = vadd.f32 %v354, %v610
        %v867 = vadd.f32 %v355, %v611
        %v868 = vadd.f32 %v356, %v612
        %v869 = vadd.f32 %v357, %v613
        %v870 = vadd.f32 %v358, %v614
        %v871 = vadd.f32 %v359, %v615
        %v872 = vadd.f32 %v360, %v616
        %v873 = vadd.f32 %v361, %v617
        %v874 = vadd.f32 %v362, %v618
        %v875 = vadd.f32 %v363, %v619
        %v876 = vadd.f32 %v364, %v620
        %v877 = vadd.f32 %v365, %v621
        %v878 = vadd.f32 %v366, %v622
        %v879 = vadd.f32 %v367, %v623
        %v880 = vadd.f32 %v368, %v624
        %v881 = vadd.f32 %v369, %v625
        %v882 = vadd.f32 %v370, %v626
        %v883 = vadd.f32 %v371, %v627
        %v884 = vadd.f32 %v372, %v628
        %v885 = vadd.f32 %v373, %v629
        %v886 = vadd.f32 %v374, %v630
        %v887 = vadd.f32 %v375, %v631
        %v888 = vadd.f32 %v376, %v632
        %v889 = vadd.f32 %v377, %v633
        %v890 = vadd.f32 %v378, %v634
        %v891 = vadd.f32 %v379, %v635
        %v892 = vadd.f32 %v380, %v636
        %v893 = vadd.f32 %v381, %v637
        %v894 = vadd.f32 %v382, %v638
        %v895 = vadd.f32 %v383, %v639
        %v896 = vadd.f32 %v384, %v640
        %v897 = vadd.f32 %v385, %v641
        %v898 = vadd.f32 %v386, %v642
        %v899 = vadd.f32 %v387, %v643
        %v900 = vadd.f32 %v388, %v644
        %v901 = vadd.f32 %v389, %v645
        %v902 = vadd.f32 %v390, %v646
        %v903 = vadd.f32 %v391, %v647
        %v904 = vadd.f32 %v392, %v648
        %v905 = vadd.f32 %v393, %v649
        %v906 = vadd.f32 %v394, %v650
        %v907 = vadd.f32 %v395, %v651
        %v908 = vadd.f32 %v396, %v652
        %v909 = vadd.f32 %v397, %v653
        %v910 = vadd.f32 %v398, %v654
        %v911 = vadd.f32 %v399, %v655
        %v912 = vadd.f32 %v400, %v656
        %v913 = vadd.f32 %v401, %v657
        %v914 = vadd.f32 %v402, %v658
        %v915 = vadd.f32 %v403, %v659
        %v916 = vadd.f32 %v404, %v660
        %v917 = vadd.f32 %v405, %v661
        %v918 = vadd.f32 %v406, %v662
        %v919 = vadd.f32 %v407, %v663
        %v920 = vadd.f32 %v408, %v664
        %v921 = vadd.f32 %v409, %v665
        %v922 = vadd.f32 %v410, %v666
        %v923 = vadd.f32 %v411, %v667
        %v924 = vadd.f32 %v412, %v668
        %v925 = vadd.f32 %v413, %v669
        %v926 = vadd.f32 %v414, %v670
        %v927 = vadd.f32 %v415, %v671
        %v928 = vadd.f32 %v416, %v672
        %v929 = vadd.f32 %v417, %v673
        %v930 = vadd.f32 %v418, %v674
        %v931 = vadd.f32 %v419, %v675
        %v932 = vadd.f32 %v420, %v676
        %v933 = vadd.f32 %v421, %v677
        %v934 = vadd.f32 %v422, %v678
        %v935 = vadd.f32 %v423, %v679
        %v936 = vadd.f32 %v424, %v680
        %v937 = vadd.f32 %v425, %v681
        %v938 = vadd.f32 %v426, %v682
        %v939 = vadd.f32 %v427, %v683
        %v940 = vadd.f32 %v428, %v684
        %v941 = vadd.f32 %v429, %v685
        %v942 = vadd.f32 %v430, %v686
        %v943 = vadd.f32 %v431, %v687
        %v944 = vadd.f32 %v432, %v688
        %v945 = vadd.f32 %v433, %v689
        %v946 = vadd.f32 %v434, %v690
        %v947 = vadd.f32 %v435, %v691
        %v948 = vadd.f32 %v436, %v692
        %v949 = vadd.f32 %v437, %v693
        %v950 = vadd.f32 %v438, %v694
        %v951 = vadd.f32 %v439, %v695
        %v952 = vadd.f32 %v440, %v696
        %v953 = vadd.f32 %v441, %v697
        %v954 = vadd.f32 %v442, %v698
        %v955 = vadd.f32 %v443, %v699
        %v956 = vadd.f32 %v444, %v700
        %v957 = vadd.f32 %v445, %v701
        %v958 = vadd.f32 %v446, %v702
        %v959 = vadd.f32 %v447, %v703
        %v960 = vadd.f32 %v448, %v704
        %v961 = vadd.f32 %v449, %v705
        %v962 = vadd.f32 %v450, %v706
        %v963 = vadd.f32 %v451, %v707
        %v964 = vadd.f32 %v452, %v708
        %v965 = vadd.f32 %v453, %v709
        %v966 = vadd.f32 %v454, %v710
        %v967 = vadd.f32 %v455, %v711
        %v968 = vadd.f32 %v456, %v712
        %v969 = vadd.f32 %v457, %v713
        %v970 = vadd.f32 %v458, %v714
        %v971 = vadd.f32 %v459, %v715
        %v972 = vadd.f32 %v460, %v716
        %973 = vst [vmem:[%s201] sm:$0xff] %v717
        %974 = vst [vmem:[%s201 + $0x8] sm:$0xff] %v718
        %975 = vst [vmem:[%s201 + $0x10] sm:$0xff] %v719
        %976 = vst [vmem:[%s201 + $0x18] sm:$0xff] %v720
        %977 = vst [vmem:[%s201 + $0x20] sm:$0xff] %v721
        %978 = vst [vmem:[%s201 + $0x28] sm:$0xff] %v722
        %979 = vst [vmem:[%s201 + $0x30] sm:$0xff] %v723
        %980 = vst [vmem:[%s201 + $0x38] sm:$0xff] %v724
        %981 = vst [vmem:[%s201 + $0x40] sm:$0xff] %v725
        %982 = vst [vmem:[%s201 + $0x48] sm:$0xff] %v726
        %983 = vst [vmem:[%s201 + $0x50] sm:$0xff] %v727
        %984 = vst [vmem:[%s201 + $0x58] sm:$0xff] %v728
        %985 = vst [vmem:[%s201 + $0x60] sm:$0xff] %v729
        %986 = vst [vmem:[%s201 + $0x68] sm:$0xff] %v730
        %987 = vst [vmem:[%s201 + $0x70] sm:$0xff] %v731
        %988 = vst [vmem:[%s201 + $0x78] sm:$0xff] %v732
        %989 = vst [vmem:[%s201 + $0x80] sm:$0xff] %v733
        %990 = vst [vmem:[%s201 + $0x88] sm:$0xff] %v734
        %991 = vst [vmem:[%s201 + $0x90] sm:$0xff] %v735
        %992 = vst [vmem:[%s201 + $0x98] sm:$0xff] %v736
        %993 = vst [vmem:[%s201 + $0xa0] sm:$0xff] %v737
        %994 = vst [vmem:[%s201 + $0xa8] sm:$0xff] %v738
        %995 = vst [vmem:[%s201 + $0xb0] sm:$0xff] %v739
        %996 = vst [vmem:[%s201 + $0xb8] sm:$0xff] %v740
        %997 = vst [vmem:[%s201 + $0xc0] sm:$0xff] %v741
        %998 = vst [vmem:[%s201 + $0xc8] sm:$0xff] %v742
        %999 = vst [vmem:[%s201 + $0xd0] sm:$0xff] %v743
        %1000 = vst [vmem:[%s201 + $0xd8] sm:$0xff] %v744
        %1001 = vst [vmem:[%s201 + $0xe0] sm:$0xff] %v745
        %1002 = vst [vmem:[%s201 + $0xe8] sm:$0xff] %v746
        %1003 = vst [vmem:[%s201 + $0xf0] sm:$0xff] %v747
        %1004 = vst [vmem:[%s201 + $0xf8] sm:$0xff] %v748
        %1005 = vst [vmem:[%s201 + $0x100] sm:$0xff] %v749
        %1006 = vst [vmem:[%s201 + $0x108] sm:$0xff] %v750
        %1007 = vst [vmem:[%s201 + $0x110] sm:$0xff] %v751
        %1008 = vst [vmem:[%s201 + $0x118] sm:$0xff] %v752
        %1009 = vst [vmem:[%s201 + $0x120] sm:$0xff] %v753
        %1010 = vst [vmem:[%s201 + $0x128] sm:$0xff] %v754
        %1011 = vst [vmem:[%s201 + $0x130] sm:$0xff] %v755
        %1012 = vst [vmem:[%s201 + $0x138] sm:$0xff] %v756
        %1013 = vst [vmem:[%s201 + $0x140] sm:$0xff] %v757
        %1014 = vst [vmem:[%s201 + $0x148] sm:$0xff] %v758
        %1015 = vst [vmem:[%s201 + $0x150] sm:$0xff] %v759
        %1016 = vst [vmem:[%s201 + $0x158] sm:$0xff] %v760
        %1017 = vst [vmem:[%s201 + $0x160] sm:$0xff] %v761
        %1018 = vst [vmem:[%s201 + $0x168] sm:$0xff] %v762
        %1019 = vst [vmem:[%s201 + $0x170] sm:$0xff] %v763
        %1020 = vst [vmem:[%s201 + $0x178] sm:$0xff] %v764
        %1021 = vst [vmem:[%s201 + $0x180] sm:$0xff] %v765
        %1022 = vst [vmem:[%s201 + $0x188] sm:$0xff] %v766
        %1023 = vst [vmem:[%s201 + $0x190] sm:$0xff] %v767
        %1024 = vst [vmem:[%s201 + $0x198] sm:$0xff] %v768
        %1025 = vst [vmem:[%s201 + $0x1a0] sm:$0xff] %v769
        %1026 = vst [vmem:[%s201 + $0x1a8] sm:$0xff] %v770
        %1027 = vst [vmem:[%s201 + $0x1b0] sm:$0xff] %v771
        %1028 = vst [vmem:[%s201 + $0x1b8] sm:$0xff] %v772
        %1029 = vst [vmem:[%s201 + $0x1c0] sm:$0xff] %v773
        %1030 = vst [vmem:[%s201 + $0x1c8] sm:$0xff] %v774
        %1031 = vst [vmem:[%s201 + $0x1d0] sm:$0xff] %v775
        %1032 = vst [vmem:[%s201 + $0x1d8] sm:$0xff] %v776
        %1033 = vst [vmem:[%s201 + $0x1e0] sm:$0xff] %v777
        %1034 = vst [vmem:[%s201 + $0x1e8] sm:$0xff] %v778
        %1035 = vst [vmem:[%s201 + $0x1f0] sm:$0xff] %v779
        %1036 = vst [vmem:[%s201 + $0x1f8] sm:$0xff] %v780
        %1037 = vst [vmem:[%s201 + $0x200] sm:$0xff] %v781
        %1038 = vst [vmem:[%s201 + $0x208] sm:$0xff] %v782
        %1039 = vst [vmem:[%s201 + $0x210] sm:$0xff] %v783
        %1040 = vst [vmem:[%s201 + $0x218] sm:$0xff] %v784
        %1041 = vst [vmem:[%s201 + $0x220] sm:$0xff] %v785
        %1042 = vst [vmem:[%s201 + $0x228] sm:$0xff] %v786
        %1043 = vst [vmem:[%s201 + $0x230] sm:$0xff] %v787
        %1044 = vst [vmem:[%s201 + $0x238] sm:$0xff] %v788
        %1045 = vst [vmem:[%s201 + $0x240] sm:$0xff] %v789
        %1046 = vst [vmem:[%s201 + $0x248] sm:$0xff] %v790
        %1047 = vst [vmem:[%s201 + $0x250] sm:$0xff] %v791
        %1048 = vst [vmem:[%s201 + $0x258] sm:$0xff] %v792
        %1049 = vst [vmem:[%s201 + $0x260] sm:$0xff] %v793
        %1050 = vst [vmem:[%s201 + $0x268] sm:$0xff] %v794
        %1051 = vst [vmem:[%s201 + $0x270] sm:$0xff] %v795
        %1052 = vst [vmem:[%s201 + $0x278] sm:$0xff] %v796
        %1053 = vst [vmem:[%s201 + $0x280] sm:$0xff] %v797
        %1054 = vst [vmem:[%s201 + $0x288] sm:$0xff] %v798
        %1055 = vst [vmem:[%s201 + $0x290] sm:$0xff] %v799
        %1056 = vst [vmem:[%s201 + $0x298] sm:$0xff] %v800
        %1057 = vst [vmem:[%s201 + $0x2a0] sm:$0xff] %v801
        %1058 = vst [vmem:[%s201 + $0x2a8] sm:$0xff] %v802
        %1059 = vst [vmem:[%s201 + $0x2b0] sm:$0xff] %v803
        %1060 = vst [vmem:[%s201 + $0x2b8] sm:$0xff] %v804
        %1061 = vst [vmem:[%s201 + $0x2c0] sm:$0xff] %v805
        %1062 = vst [vmem:[%s201 + $0x2c8] sm:$0xff] %v806
        %1063 = vst [vmem:[%s201 + $0x2d0] sm:$0xff] %v807
        %1064 = vst [vmem:[%s201 + $0x2d8] sm:$0xff] %v808
        %1065 = vst [vmem:[%s201 + $0x2e0] sm:$0xff] %v809
        %1066 = vst [vmem:[%s201 + $0x2e8] sm:$0xff] %v810
        %1067 = vst [vmem:[%s201 + $0x2f0] sm:$0xff] %v811
        %1068 = vst [vmem:[%s201 + $0x2f8] sm:$0xff] %v812
        %1069 = vst [vmem:[%s201 + $0x300] sm:$0xff] %v813
        %1070 = vst [vmem:[%s201 + $0x308] sm:$0xff] %v814
        %1071 = vst [vmem:[%s201 + $0x310] sm:$0xff] %v815
        %1072 = vst [vmem:[%s201 + $0x318] sm:$0xff] %v816
        %1073 = vst [vmem:[%s201 + $0x320] sm:$0xff] %v817
        %1074 = vst [vmem:[%s201 + $0x328] sm:$0xff] %v818
        %1075 = vst [vmem:[%s201 + $0x330] sm:$0xff] %v819
        %1076 = vst [vmem:[%s201 + $0x338] sm:$0xff] %v820
        %1077 = vst [vmem:[%s201 + $0x340] sm:$0xff] %v821
        %1078 = vst [vmem:[%s201 + $0x348] sm:$0xff] %v822
        %1079 = vst [vmem:[%s201 + $0x350] sm:$0xff] %v823
        %1080 = vst [vmem:[%s201 + $0x358] sm:$0xff] %v824
        %1081 = vst [vmem:[%s201 + $0x360] sm:$0xff] %v825
        %1082 = vst [vmem:[%s201 + $0x368] sm:$0xff] %v826
        %1083 = vst [vmem:[%s201 + $0x370] sm:$0xff] %v827
        %1084 = vst [vmem:[%s201 + $0x378] sm:$0xff] %v828
        %1085 = vst [vmem:[%s201 + $0x380] sm:$0xff] %v829
        %1086 = vst [vmem:[%s201 + $0x388] sm:$0xff] %v830
        %1087 = vst [vmem:[%s201 + $0x390] sm:$0xff] %v831
        %1088 = vst [vmem:[%s201 + $0x398] sm:$0xff] %v832
        %1089 = vst [vmem:[%s201 + $0x3a0] sm:$0xff] %v833
        %1090 = vst [vmem:[%s201 + $0x3a8] sm:$0xff] %v834
        %1091 = vst [vmem:[%s201 + $0x3b0] sm:$0xff] %v835
        %1092 = vst [vmem:[%s201 + $0x3b8] sm:$0xff] %v836
        %1093 = vst [vmem:[%s201 + $0x3c0] sm:$0xff] %v837
        %1094 = vst [vmem:[%s201 + $0x3c8] sm:$0xff] %v838
        %1095 = vst [vmem:[%s201 + $0x3d0] sm:$0xff] %v839
        %1096 = vst [vmem:[%s201 + $0x3d8] sm:$0xff] %v840
        %1097 = vst [vmem:[%s201 + $0x3e0] sm:$0xff] %v841
        %1098 = vst [vmem:[%s201 + $0x3e8] sm:$0xff] %v842
        %1099 = vst [vmem:[%s201 + $0x3f0] sm:$0xff] %v843
        %1100 = vst [vmem:[%s201 + $0x3f8] sm:$0xff] %v844
        %1101 = vst [vmem:[%s201 + $0x400] sm:$0xff] %v845
        %1102 = vst [vmem:[%s201 + $0x408] sm:$0xff] %v846
        %1103 = vst [vmem:[%s201 + $0x410] sm:$0xff] %v847
        %1104 = vst [vmem:[%s201 + $0x418] sm:$0xff] %v848
        %1105 = vst [vmem:[%s201 + $0x420] sm:$0xff] %v849
        %1106 = vst [vmem:[%s201 + $0x428] sm:$0xff] %v850
        %1107 = vst [vmem:[%s201 + $0x430] sm:$0xff] %v851
        %1108 = vst [vmem:[%s201 + $0x438] sm:$0xff] %v852
        %1109 = vst [vmem:[%s201 + $0x440] sm:$0xff] %v853
        %1110 = vst [vmem:[%s201 + $0x448] sm:$0xff] %v854
        %1111 = vst [vmem:[%s201 + $0x450] sm:$0xff] %v855
        %1112 = vst [vmem:[%s201 + $0x458] sm:$0xff] %v856
        %1113 = vst [vmem:[%s201 + $0x460] sm:$0xff] %v857
        %1114 = vst [vmem:[%s201 + $0x468] sm:$0xff] %v858
        %1115 = vst [vmem:[%s201 + $0x470] sm:$0xff] %v859
        %1116 = vst [vmem:[%s201 + $0x478] sm:$0xff] %v860
        %1117 = vst [vmem:[%s201 + $0x480] sm:$0xff] %v861
        %1118 = vst [vmem:[%s201 + $0x488] sm:$0xff] %v862
        %1119 = vst [vmem:[%s201 + $0x490] sm:$0xff] %v863
        %1120 = vst [vmem:[%s201 + $0x498] sm:$0xff] %v864
        %1121 = vst [vmem:[%s201 + $0x4a0] sm:$0xff] %v865
        %1122 = vst [vmem:[%s201 + $0x4a8] sm:$0xff] %v866
        %1123 = vst [vmem:[%s201 + $0x4b0] sm:$0xff] %v867
        %1124 = vst [vmem:[%s201 + $0x4b8] sm:$0xff] %v868
        %1125 = vst [vmem:[%s201 + $0x4c0] sm:$0xff] %v869
        %1126 = vst [vmem:[%s201 + $0x4c8] sm:$0xff] %v870
        %1127 = vst [vmem:[%s201 + $0x4d0] sm:$0xff] %v871
        %1128 = vst [vmem:[%s201 + $0x4d8] sm:$0xff] %v872
        %1129 = vst [vmem:[%s201 + $0x4e0] sm:$0xff] %v873
        %1130 = vst [vmem:[%s201 + $0x4e8] sm:$0xff] %v874
        %1131 = vst [vmem:[%s201 + $0x4f0] sm:$0xff] %v875
        %1132 = vst [vmem:[%s201 + $0x4f8] sm:$0xff] %v876
        %1133 = vst [vmem:[%s201 + $0x500] sm:$0xff] %v877
        %1134 = vst [vmem:[%s201 + $0x508] sm:$0xff] %v878
        %1135 = vst [vmem:[%s201 + $0x510] sm:$0xff] %v879
        %1136 = vst [vmem:[%s201 + $0x518] sm:$0xff] %v880
        %1137 = vst [vmem:[%s201 + $0x520] sm:$0xff] %v881
        %1138 = vst [vmem:[%s201 + $0x528] sm:$0xff] %v882
        %1139 = vst [vmem:[%s201 + $0x530] sm:$0xff] %v883
        %1140 = vst [vmem:[%s201 + $0x538] sm:$0xff] %v884
        %1141 = vst [vmem:[%s201 + $0x540] sm:$0xff] %v885
        %1142 = vst [vmem:[%s201 + $0x548] sm:$0xff] %v886
        %1143 = vst [vmem:[%s201 + $0x550] sm:$0xff] %v887
        %1144 = vst [vmem:[%s201 + $0x558] sm:$0xff] %v888
        %1145 = vst [vmem:[%s201 + $0x560] sm:$0xff] %v889
        %1146 = vst [vmem:[%s201 + $0x568] sm:$0xff] %v890
        %1147 = vst [vmem:[%s201 + $0x570] sm:$0xff] %v891
        %1148 = vst [vmem:[%s201 + $0x578] sm:$0xff] %v892
        %1149 = vst [vmem:[%s201 + $0x580] sm:$0xff] %v893
        %1150 = vst [vmem:[%s201 + $0x588] sm:$0xff] %v894
        %1151 = vst [vmem:[%s201 + $0x590] sm:$0xff] %v895
        %1152 = vst [vmem:[%s201 + $0x598] sm:$0xff] %v896
        %1153 = vst [vmem:[%s201 + $0x5a0] sm:$0xff] %v897
        %1154 = vst [vmem:[%s201 + $0x5a8] sm:$0xff] %v898
        %1155 = vst [vmem:[%s201 + $0x5b0] sm:$0xff] %v899
        %1156 = vst [vmem:[%s201 + $0x5b8] sm:$0xff] %v900
        %1157 = vst [vmem:[%s201 + $0x5c0] sm:$0xff] %v901
        %1158 = vst [vmem:[%s201 + $0x5c8] sm:$0xff] %v902
        %1159 = vst [vmem:[%s201 + $0x5d0] sm:$0xff] %v903
        %1160 = vst [vmem:[%s201 + $0x5d8] sm:$0xff] %v904
        %1161 = vst [vmem:[%s201 + $0x5e0] sm:$0xff] %v905
        %1162 = vst [vmem:[%s201 + $0x5e8] sm:$0xff] %v906
        %1163 = vst [vmem:[%s201 + $0x5f0] sm:$0xff] %v907
        %1164 = vst [vmem:[%s201 + $0x5f8] sm:$0xff] %v908
        %1165 = vst [vmem:[%s201 + $0x600] sm:$0xff] %v909
        %1166 = vst [vmem:[%s201 + $0x608] sm:$0xff] %v910
        %1167 = vst [vmem:[%s201 + $0x610] sm:$0xff] %v911
        %1168 = vst [vmem:[%s201 + $0x618] sm:$0xff] %v912
        %1169 = vst [vmem:[%s201 + $0x620] sm:$0xff] %v913
        %1170 = vst [vmem:[%s201 + $0x628] sm:$0xff] %v914
        %1171 = vst [vmem:[%s201 + $0x630] sm:$0xff] %v915
        %1172 = vst [vmem:[%s201 + $0x638] sm:$0xff] %v916
        %1173 = vst [vmem:[%s201 + $0x640] sm:$0xff] %v917
        %1174 = vst [vmem:[%s201 + $0x648] sm:$0xff] %v918
        %1175 = vst [vmem:[%s201 + $0x650] sm:$0xff] %v919
        %1176 = vst [vmem:[%s201 + $0x658] sm:$0xff] %v920
        %1177 = vst [vmem:[%s201 + $0x660] sm:$0xff] %v921
        %1178 = vst [vmem:[%s201 + $0x668] sm:$0xff] %v922
        %1179 = vst [vmem:[%s201 + $0x670] sm:$0xff] %v923
        %1180 = vst [vmem:[%s201 + $0x678] sm:$0xff] %v924
        %1181 = vst [vmem:[%s201 + $0x680] sm:$0xff] %v925
        %1182 = vst [vmem:[%s201 + $0x688] sm:$0xff] %v926
        %1183 = vst [vmem:[%s201 + $0x690] sm:$0xff] %v927
        %1184 = vst [vmem:[%s201 + $0x698] sm:$0xff] %v928
        %1185 = vst [vmem:[%s201 + $0x6a0] sm:$0xff] %v929
        %1186 = vst [vmem:[%s201 + $0x6a8] sm:$0xff] %v930
        %1187 = vst [vmem:[%s201 + $0x6b0] sm:$0xff] %v931
        %1188 = vst [vmem:[%s201 + $0x6b8] sm:$0xff] %v932
        %1189 = vst [vmem:[%s201 + $0x6c0] sm:$0xff] %v933
        %1190 = vst [vmem:[%s201 + $0x6c8] sm:$0xff] %v934
        %1191 = vst [vmem:[%s201 + $0x6d0] sm:$0xff] %v935
        %1192 = vst [vmem:[%s201 + $0x6d8] sm:$0xff] %v936
        %1193 = vst [vmem:[%s201 + $0x6e0] sm:$0xff] %v937
        %1194 = vst [vmem:[%s201 + $0x6e8] sm:$0xff] %v938
        %1195 = vst [vmem:[%s201 + $0x6f0] sm:$0xff] %v939
        %1196 = vst [vmem:[%s201 + $0x6f8] sm:$0xff] %v940
        %1197 = vst [vmem:[%s201 + $0x700] sm:$0xff] %v941
        %1198 = vst [vmem:[%s201 + $0x708] sm:$0xff] %v942
        %1199 = vst [vmem:[%s201 + $0x710] sm:$0xff] %v943
        %1200 = vst [vmem:[%s201 + $0x718] sm:$0xff] %v944
        %1201 = vst [vmem:[%s201 + $0x720] sm:$0xff] %v945
        %1202 = vst [vmem:[%s201 + $0x728] sm:$0xff] %v946
        %1203 = vst [vmem:[%s201 + $0x730] sm:$0xff] %v947
        %1204 = vst [vmem:[%s201 + $0x738] sm:$0xff] %v948
        %1205 = vst [vmem:[%s201 + $0x740] sm:$0xff] %v949
        %1206 = vst [vmem:[%s201 + $0x748] sm:$0xff] %v950
        %1207 = vst [vmem:[%s201 + $0x750] sm:$0xff] %v951
        %1208 = vst [vmem:[%s201 + $0x758] sm:$0xff] %v952
        %1209 = vst [vmem:[%s201 + $0x760] sm:$0xff] %v953
        %1210 = vst [vmem:[%s201 + $0x768] sm:$0xff] %v954
        %1211 = vst [vmem:[%s201 + $0x770] sm:$0xff] %v955
        %1212 = vst [vmem:[%s201 + $0x778] sm:$0xff] %v956
        %1213 = vst [vmem:[%s201 + $0x780] sm:$0xff] %v957
        %1214 = vst [vmem:[%s201 + $0x788] sm:$0xff] %v958
        %1215 = vst [vmem:[%s201 + $0x790] sm:$0xff] %v959
        %1216 = vst [vmem:[%s201 + $0x798] sm:$0xff] %v960
        %1217 = vst [vmem:[%s201 + $0x7a0] sm:$0xff] %v961
        %1218 = vst [vmem:[%s201 + $0x7a8] sm:$0xff] %v962
        %1219 = vst [vmem:[%s201 + $0x7b0] sm:$0xff] %v963
        %1220 = vst [vmem:[%s201 + $0x7b8] sm:$0xff] %v964
        %1221 = vst [vmem:[%s201 + $0x7c0] sm:$0xff] %v965
        %1222 = vst [vmem:[%s201 + $0x7c8] sm:$0xff] %v966
        %1223 = vst [vmem:[%s201 + $0x7d0] sm:$0xff] %v967
        %1224 = vst [vmem:[%s201 + $0x7d8] sm:$0xff] %v968
        %1225 = vst [vmem:[%s201 + $0x7e0] sm:$0xff] %v969
        %1226 = vst [vmem:[%s201 + $0x7e8] sm:$0xff] %v970
        %1227 = vst [vmem:[%s201 + $0x7f0] sm:$0xff] %v971
        %1228 = vst [vmem:[%s201 + $0x7f8] sm:$0xff] %v972
        %s1229 = sand.u32 %s82, 1
        %s1230 = scalar_lea.sflag [#allocation4], %s1229
        %s1231 = sand.u32 %s82, 1
        %s1232 = smul.addr %s1231, 2048
        %s1233 = scalar_lea.vmem [#allocation7], %s1232
        // Predicated region
        $region37: #{tpu_custom_call.1} parent=27 // pred_check
          %p1234 = pneg %p92
        $region38: #{tpu_custom_call.1} parent=27 // pred_check_branch
          %1236 = sbr.rel (%p1234) target = $region40
        $region39: #{tpu_custom_call.1} parent=27 // pred_region
          %s1237 = smul.u32 256, %s22
          %s1239 = ssub.s32 32768, 32768
          %1240 = vsyncadd %s1230, %s1239
          %s1241 = smul.addr %s1237, 128
          %s1242 = scalar_lea.hbm %s2, %s1241
          %s1243 = sshll.u32 %s1233, 4
          %s1244 = int_to_ptr.vmem [resolvable:$true] %s1243
          %1249 = dma.vmem_to_hbm [thread:$0]  %s1244, 32768, %s1242, %s1230, 128, 128, 8
        $region40: #{tpu_custom_call.1} parent=27 // pred_fallthru
          _
      $region28: #{tpu_custom_call.1} parent=5 // pred_fallthru
        _
      %p1250 = scmp.le.s32.totalorder 2, %s17
      // Predicated region
      $region41: #{tpu_custom_call.1} parent=5 // pred_check
        %p1251 = pneg %p1250
      $region42: #{tpu_custom_call.1} parent=5 // pred_check_branch
        %1253 = sbr.rel (%p1251) target = $region44
      $region43: #{tpu_custom_call.1} parent=5 // pred_region
        %s1254 = ssub.s32 %s17, 2
        // Predicated region
        $region45: #{tpu_custom_call.1} parent=43 // pred_check
          %p1255 = pneg %p98
        $region46: #{tpu_custom_call.1} parent=43 // pred_check_branch
          %1257 = sbr.rel (%p1255) target = $region48
        $region47: #{tpu_custom_call.1} parent=43 // pred_region
          %s1258 = sand.u32 %s83, 1
          %s1259 = scalar_lea.sflag [#allocation4], %s1258
          %s1260 = sand.u32 %s83, 1
          %s1261 = smul.addr %s1260, 2048
          %s1262 = scalar_lea.vmem [#allocation7], %s1261
          %1263 = dma.done %s1259, 32768
        $region48: #{tpu_custom_call.1} parent=43 // pred_fallthru
          _
      $region44: #{tpu_custom_call.1} parent=5 // pred_fallthru
        _
    $region6: #{tpu_custom_call.1} parent=1 // loop_footer
      %s21 = sadd.s32 1, %s17
    $region7: #{tpu_custom_call.1} parent=1 // loop_footer_branch
      %16 = sbr.rel target = $region3
    $region8: #{tpu_custom_call.1} parent=1 // loop_exit
      _
    %1264 = vsyncpa [#allocation3], 1
    %s1265 = scalar_lea.sflag [#allocation3], 1
    %1266 = vsyncpa %s1265, 1
    %1267 = vsyncpa [#allocation6], 1
    %s1268 = scalar_lea.sflag [#allocation6], 1
    %1269 = vsyncpa %s1268, 1
    %1270 = vsyncpa [#allocation4], 1
    %s1271 = scalar_lea.sflag [#allocation4], 1
    %1272 = vsyncpa %s1271, 1

</llo_original>
